<compile_context>
chip_gen: v6e
topology: v6e:2x2x1
jax: 0.10.0
libtpu: 0.0.40
codegen_flags: <defaults>
</compile_context>

<pallas_src>
import jax
import jax.numpy as jnp
from jax.experimental import pallas as pl
from jax.experimental.pallas import tpu as pltpu  # noqa: F401  (kept for TPU-specific tuning hooks)


# ------------------------------- fused kernel -------------------------------

def _make_ernn_kernel(meta, seq, b_pad):
    """meta: static dict produced by pack_ernn_params (row offsets into the packed buffer)."""
    hid = meta["H"]
    two_h = 2 * hid
    layer_meta = meta["layers"]
    cls_w_off = meta["cls_w_off"]
    cls_b_off = meta["cls_b_off"]

    def kernel(x_ref, w_ref, out_ref):
        # x_ref   : (S*B_pad, D)   time-major, batch padded to a sublane tile
        # w_ref   : (R, 2H)        all weights/biases, 8-aligned row blocks
        # out_ref : (B_pad, S)
        cur = x_ref[...]                                            # (S*B, D)

        for (wih_off, din, whh_off, b_off) in layer_meta:
            wih = w_ref[pl.ds(wih_off, din), :]                     # (Din, 2H)  [fwd | bwd]
            whh = w_ref[pl.ds(whh_off, two_h), :]                   # (2H, 2H)   block-diagonal
            bias = w_ref[pl.ds(b_off, 1), :]                        # (1, 2H)

            # Hoisted input projection for both directions: one MXU pass per layer.
            xw = jnp.dot(cur, wih, preferred_element_type=jnp.float32) + bias   # (S*B, 2H)

            # Align fwd/bwd time order ONCE (outside the serial chain):
            # step block i = [xw_fwd(t=i) | xw_bwd(t=S-1-i)], each an aligned 8-row view.
            xw_b_rev = jnp.concatenate(
                [xw[(seq - 1 - t) * b_pad:(seq - t) * b_pad, hid:] for t in range(seq)],
                axis=0,
            )                                                        # (S*B, H)
            x_steps = jnp.concatenate([xw[:, :hid], xw_b_rev], axis=1)   # (S*B, 2H)

            # Serial recurrence (fully unrolled): one 64x64 MXU matmul + add + tanh per step.
            h = jnp.zeros((b_pad, two_h), jnp.float32)               # [h_fwd | h_bwd]
            hs = []
            for i in range(seq):
                h = jnp.tanh(
                    x_steps[i * b_pad:(i + 1) * b_pad, :]
                    + jnp.dot(h, whh, preferred_element_type=jnp.float32)
                )
                hs.append(h)

            # Un-align once per layer: time-reverse the bwd lane-half -> [fwd(t) | bwd(t)].
            h_all = jnp.concatenate(hs, axis=0)                      # (S*B, 2H), step-ordered
            h_b_rev = jnp.concatenate(
                [h_all[(seq - 1 - t) * b_pad:(seq - t) * b_pad, hid:] for t in range(seq)],
                axis=0,
            )
            cur = jnp.concatenate([h_all[:, :hid], h_b_rev], axis=1)  # (S*B, 2H), time-ordered

        # ---- classifier: Linear(2H -> 1) + Sigmoid as VPU multiply + lane reduce ----
        w_cls = w_ref[pl.ds(cls_w_off, 1), :]                         # (1, 2H)
        cls_b = w_ref[pl.ds(cls_b_off, 1), :][:, 0:1]                 # (1, 1)
        z = jnp.sum(cur * w_cls, axis=1, keepdims=True) + cls_b       # (S*B, 1)

        # Assemble one aligned (B_pad, S) block from full-sublane-tile slices.
        z_bs = jnp.concatenate(
            [z[t * b_pad:(t + 1) * b_pad, :] for t in range(seq)], axis=1
        )                                                             # (B_pad, S)
        out_ref[...] = jax.nn.sigmoid(z_bs)

    return kernel


def ernn_forward(x, packed_buf, meta):
    """x: (B, S, num_in) float32 ; packed_buf/meta: output of pack_ernn_params."""
    b, s, d = x.shape
    b_pad = max(8, ((b + 7) // 8) * 8)

    # Single transpose to time-major, batch padded to a sublane tile, flattened to (S*B_pad, D).
    x_tm = jnp.transpose(x, (1, 0, 2))                                # (S, B, D)
    if b_pad != b:
        x_tm = jnp.pad(x_tm, ((0, 0), (0, b_pad - b), (0, 0)))
    x_flat = x_tm.reshape(s * b_pad, d)

    out = pl.pallas_call(
        _make_ernn_kernel(meta, s, b_pad),
        out_shape=jax.ShapeDtypeStruct((b_pad, s), jnp.float32),
    )(x_flat, packed_buf)                                             # (B_pad, S)

    return out[:b, :, None]                                           # (B, S, 1) like PyTorch


# ----------------------------- parameter setup -----------------------------

def init_ernn_params(key, num_in, num_layers):
    """Deterministic synthetic init mirroring PyTorch shapes (weights stored transposed)."""
    n_hidden = num_in
    params = {}
    k = key

    def uniform(k, shape, bound):
        return jax.random.uniform(k, shape, jnp.float32, -bound, bound)

    # Input Linear(num_in -> n_hidden)
    k, k1, k2 = jax.random.split(k, 3)
    bnd = 1.0 / (num_in ** 0.5)
    params["lin_w_t"] = uniform(k1, (num_in, n_hidden), bnd)
    params["lin_b"] = uniform(k2, (n_hidden,), bnd)

    # Bidirectional RNN layers (per-direction weights, pre-transposed to (in, out))
    bnd = 1.0 / (n_hidden ** 0.5)
    layers = []
    for layer in range(num_layers):
        din = n_hidden if layer == 0 else 2 * n_hidden
        dirs = []
        for _direction in range(2):  # 0 = forward, 1 = backward
            k, k1, k2, k3, k4 = jax.random.split(k, 5)
            w_ih_t = uniform(k1, (din, n_hidden), bnd)
            w_hh_t = uniform(k2, (n_hidden, n_hidden), bnd)
            b_ih = uniform(k3, (n_hidden,), bnd)
            b_hh = uniform(k4, (n_hidden,), bnd)
            dirs.append({"w_ih_t": w_ih_t, "w_hh_t": w_hh_t, "b": b_ih + b_hh})
        layers.append(dirs)
    params["rnn_layers"] = layers

    # Classifier Linear(2*n_hidden -> 1)
    k, k1, k2 = jax.random.split(k, 3)
    bnd = 1.0 / ((2 * n_hidden) ** 0.5)
    params["cls_w_t"] = uniform(k1, (2 * n_hidden, 1), bnd)
    params["cls_b"] = uniform(k2, (1,), bnd)
    return params


def pack_ernn_params(params):
    """Pack all weights into ONE (rows, 2H) buffer (8-aligned row blocks) + static metadata.

    - The input Linear is folded into layer-0's input projection (exact affine composition).
    - Per layer: [w_ih_fb (Din,2H)] [w_hh block-diag (2H,2H)] [bias (1,2H)].
    - Tail: classifier weight row and bias row.
    """
    lin_w_t = params["lin_w_t"]                       # (D, H)
    d_in, h = lin_w_t.shape
    two_h = 2 * h
    lin_b = params["lin_b"].reshape(1, h)
    zeros_hh = jnp.zeros((h, h), jnp.float32)

    blocks = []
    row = 0

    def add(arr):
        nonlocal row
        r = arr.shape[0]
        rp = ((r + 7) // 8) * 8
        if rp != r:
            arr = jnp.pad(arr, ((0, rp - r), (0, 0)))
        off = row
        row += rp
        blocks.append(arr.astype(jnp.float32))
        return off

    layer_meta = []
    for idx, dirs in enumerate(params["rnn_layers"]):
        fwd, bwd = dirs[0], dirs[1]
        w_ih_fb = jnp.concatenate([fwd["w_ih_t"], bwd["w_ih_t"]], axis=1)       # (Din, 2H)
        b_fb = jnp.concatenate([fwd["b"], bwd["b"]], axis=0).reshape(1, two_h)  # (1, 2H)
        if idx == 0:
            # Fold input Linear into layer 0: x@(Lw@Wih) + (Lb@Wih + b) == (x@Lw + Lb)@Wih + b
            w_ih = lin_w_t @ w_ih_fb                                            # (D, 2H)
            b = lin_b @ w_ih_fb + b_fb                                          # (1, 2H)
        else:
            w_ih = w_ih_fb
            b = b_fb
        w_hh_bd = jnp.concatenate(
            [jnp.concatenate([fwd["w_hh_t"], zeros_hh], axis=1),
             jnp.concatenate([zeros_hh, bwd["w_hh_t"]], axis=1)],
            axis=0,
        )                                                                        # (2H, 2H)
        wih_off = add(w_ih)
        whh_off = add(w_hh_bd)
        b_off = add(b)
        layer_meta.append((wih_off, int(w_ih.shape[0]), whh_off, b_off))

    cls_w_off = add(params["cls_w_t"].reshape(1, two_h))
    cls_b_row = jnp.zeros((1, two_h), jnp.float32).at[0, 0].set(params["cls_b"][0])
    cls_b_off = add(cls_b_row)

    buf = jnp.concatenate(blocks, axis=0)                                        # (R, 2H)
    meta = {
        "H": h,
        "layers": tuple(layer_meta),
        "cls_w_off": cls_w_off,
        "cls_b_off": cls_b_off,
        "rows": row,
    }
    return buf, meta


# ------------------------------ pure-JAX reference ------------------------------

def ernn_reference(x, params):
    b, s, d = x.shape
    h = d
    y = x.reshape(b * s, d) @ params["lin_w_t"] + params["lin_b"]
    layer_in = y.reshape(b, s, h)
    for dirs in params["rnn_layers"]:
        outs = []
        for direction in range(2):
            p = dirs[direction]
            xs = layer_in if direction == 0 else layer_in[:, ::-1, :]
            h_t = jnp.zeros((b, h), jnp.float32)
            hs = []
            for t in range(s):
                h_t = jnp.tanh(xs[:, t, :] @ p["w_ih_t"] + h_t @ p["w_hh_t"] + p["b"])
                hs.append(h_t)
            out = jnp.stack(hs, axis=1)  # (B, S, H)
            if direction == 1:
                out = out[:, ::-1, :]
            outs.append(out)
        layer_in = jnp.concatenate(outs, axis=-1)
    z = layer_in.reshape(b * s, 2 * h) @ params["cls_w_t"] + params["cls_b"]
    return jax.nn.sigmoid(z).reshape(b, s, 1)


# ----------------------------------- main -----------------------------------

if __name__ == "__main__":
    B, S, NUM_IN, NUM_LAYERS = 2, 8, 32, 2

    key = jax.random.PRNGKey(0)
    kx, kp = jax.random.split(key)
    x = jax.random.normal(kx, (B, S, NUM_IN), dtype=jnp.float32)
    params = init_ernn_params(kp, NUM_IN, NUM_LAYERS)
    packed_buf, meta = pack_ernn_params(params)

    fwd = jax.jit(lambda xx, ww: ernn_forward(xx, ww, meta))
    out = jax.block_until_ready(fwd(x, packed_buf))

    assert out.shape == (B, S, 1), out.shape

    ref = ernn_reference(x, params)
    assert jnp.allclose(out, ref, rtol=1e-3, atol=1e-3), (
        float(jnp.max(jnp.abs(out - ref)))
    )

    print("KERNEL_OK")
</pallas_src>

<mosaic_0001>
module attributes {stable_mosaic.version = 11 : i64} {
  func.func @kernel(%arg0: memref<64x32xf32, #tpu.memory_space<vmem>>, %arg1: memref<256x64xf32, #tpu.memory_space<vmem>>, %arg2: memref<8x8xf32, #tpu.memory_space<vmem>>) attributes {dimension_semantics = [], scalar_prefetch = 0 : i64, scratch_operands = 0 : i64, tpu.core_type = #tpu.core_type<tc>} {
    %c0 = arith.constant 0 : index
    %c0_0 = arith.constant 0 : index
    %0 = vector.load %arg0[%c0, %c0_0] : memref<64x32xf32, #tpu.memory_space<vmem>>, vector<64x32xf32>
    %c0_1 = arith.constant 0 : index
    %c0_2 = arith.constant 0 : index
    %1 = vector.load %arg1[%c0_1, %c0_2] : memref<256x64xf32, #tpu.memory_space<vmem>>, vector<32x64xf32>
    %c32 = arith.constant 32 : index
    %c0_3 = arith.constant 0 : index
    %2 = vector.load %arg1[%c32, %c0_3] : memref<256x64xf32, #tpu.memory_space<vmem>>, vector<64x64xf32>
    %c96 = arith.constant 96 : index
    %c0_4 = arith.constant 0 : index
    %3 = vector.load %arg1[%c96, %c0_4] : memref<256x64xf32, #tpu.memory_space<vmem>>, vector<1x64xf32>
    %cst = arith.constant dense<0.000000e+00> : vector<64x64xf32>
    %4 = tpu.matmul %0, %1, %cst {dimension_numbers = #tpu.dot_dimension_numbers<[1], [0], [0], [1], [0, 0, 1, 1], [], []>} : vector<64x32xf32>, vector<32x64xf32>, vector<64x64xf32> -> vector<64x64xf32>
    %5 = vector.broadcast %3 : vector<1x64xf32> to vector<64x64xf32>
    %6 = arith.addf %4, %5 : vector<64x64xf32>
    %7 = vector.extract_strided_slice %6 {offsets = [56, 32], sizes = [8, 32], strides = [1, 1]} : vector<64x64xf32> to vector<8x32xf32>
    %8 = vector.extract_strided_slice %6 {offsets = [48, 32], sizes = [8, 32], strides = [1, 1]} : vector<64x64xf32> to vector<8x32xf32>
    %9 = vector.extract_strided_slice %6 {offsets = [40, 32], sizes = [8, 32], strides = [1, 1]} : vector<64x64xf32> to vector<8x32xf32>
    %10 = vector.extract_strided_slice %6 {offsets = [32, 32], sizes = [8, 32], strides = [1, 1]} : vector<64x64xf32> to vector<8x32xf32>
    %11 = vector.extract_strided_slice %6 {offsets = [24, 32], sizes = [8, 32], strides = [1, 1]} : vector<64x64xf32> to vector<8x32xf32>
    %12 = vector.extract_strided_slice %6 {offsets = [16, 32], sizes = [8, 32], strides = [1, 1]} : vector<64x64xf32> to vector<8x32xf32>
    %13 = vector.extract_strided_slice %6 {offsets = [8, 32], sizes = [8, 32], strides = [1, 1]} : vector<64x64xf32> to vector<8x32xf32>
    %14 = vector.extract_strided_slice %6 {offsets = [0, 32], sizes = [8, 32], strides = [1, 1]} : vector<64x64xf32> to vector<8x32xf32>
    %15 = tpu.concatenate %7, %8, %9, %10, %11, %12, %13, %14 in 0 : vector<8x32xf32>, vector<8x32xf32>, vector<8x32xf32>, vector<8x32xf32>, vector<8x32xf32>, vector<8x32xf32>, vector<8x32xf32>, vector<8x32xf32> -> vector<64x32xf32>
    %16 = vector.extract_strided_slice %6 {offsets = [0, 0], sizes = [64, 32], strides = [1, 1]} : vector<64x64xf32> to vector<64x32xf32>
    %17 = tpu.concatenate %16, %15 in 1 : vector<64x32xf32>, vector<64x32xf32> -> vector<64x64xf32>
    %cst_5 = arith.constant 0.000000e+00 : f32
    %18 = vector.broadcast %cst_5 : f32 to vector<8x64xf32>
    %19 = vector.extract_strided_slice %17 {offsets = [0, 0], sizes = [8, 64], strides = [1, 1]} : vector<64x64xf32> to vector<8x64xf32>
    %cst_6 = arith.constant dense<0.000000e+00> : vector<8x64xf32>
    %20 = tpu.matmul %18, %2, %cst_6 {dimension_numbers = #tpu.dot_dimension_numbers<[1], [0], [0], [1], [0, 0, 1, 1], [], []>} : vector<8x64xf32>, vector<64x64xf32>, vector<8x64xf32> -> vector<8x64xf32>
    %21 = arith.addf %19, %20 : vector<8x64xf32>
    %22 = math.tanh %21 : vector<8x64xf32>
    %23 = vector.extract_strided_slice %17 {offsets = [8, 0], sizes = [8, 64], strides = [1, 1]} : vector<64x64xf32> to vector<8x64xf32>
    %cst_7 = arith.constant dense<0.000000e+00> : vector<8x64xf32>
    %24 = tpu.matmul %22, %2, %cst_7 {dimension_numbers = #tpu.dot_dimension_numbers<[1], [0], [0], [1], [0, 0, 1, 1], [], []>} : vector<8x64xf32>, vector<64x64xf32>, vector<8x64xf32> -> vector<8x64xf32>
    %25 = arith.addf %23, %24 : vector<8x64xf32>
    %26 = math.tanh %25 : vector<8x64xf32>
    %27 = vector.extract_strided_slice %17 {offsets = [16, 0], sizes = [8, 64], strides = [1, 1]} : vector<64x64xf32> to vector<8x64xf32>
    %cst_8 = arith.constant dense<0.000000e+00> : vector<8x64xf32>
    %28 = tpu.matmul %26, %2, %cst_8 {dimension_numbers = #tpu.dot_dimension_numbers<[1], [0], [0], [1], [0, 0, 1, 1], [], []>} : vector<8x64xf32>, vector<64x64xf32>, vector<8x64xf32> -> vector<8x64xf32>
    %29 = arith.addf %27, %28 : vector<8x64xf32>
    %30 = math.tanh %29 : vector<8x64xf32>
    %31 = vector.extract_strided_slice %17 {offsets = [24, 0], sizes = [8, 64], strides = [1, 1]} : vector<64x64xf32> to vector<8x64xf32>
    %cst_9 = arith.constant dense<0.000000e+00> : vector<8x64xf32>
    %32 = tpu.matmul %30, %2, %cst_9 {dimension_numbers = #tpu.dot_dimension_numbers<[1], [0], [0], [1], [0, 0, 1, 1], [], []>} : vector<8x64xf32>, vector<64x64xf32>, vector<8x64xf32> -> vector<8x64xf32>
    %33 = arith.addf %31, %32 : vector<8x64xf32>
    %34 = math.tanh %33 : vector<8x64xf32>
    %35 = vector.extract_strided_slice %17 {offsets = [32, 0], sizes = [8, 64], strides = [1, 1]} : vector<64x64xf32> to vector<8x64xf32>
    %cst_10 = arith.constant dense<0.000000e+00> : vector<8x64xf32>
    %36 = tpu.matmul %34, %2, %cst_10 {dimension_numbers = #tpu.dot_dimension_numbers<[1], [0], [0], [1], [0, 0, 1, 1], [], []>} : vector<8x64xf32>, vector<64x64xf32>, vector<8x64xf32> -> vector<8x64xf32>
    %37 = arith.addf %35, %36 : vector<8x64xf32>
    %38 = math.tanh %37 : vector<8x64xf32>
    %39 = vector.extract_strided_slice %17 {offsets = [40, 0], sizes = [8, 64], strides = [1, 1]} : vector<64x64xf32> to vector<8x64xf32>
    %cst_11 = arith.constant dense<0.000000e+00> : vector<8x64xf32>
    %40 = tpu.matmul %38, %2, %cst_11 {dimension_numbers = #tpu.dot_dimension_numbers<[1], [0], [0], [1], [0, 0, 1, 1], [], []>} : vector<8x64xf32>, vector<64x64xf32>, vector<8x64xf32> -> vector<8x64xf32>
    %41 = arith.addf %39, %40 : vector<8x64xf32>
    %42 = math.tanh %41 : vector<8x64xf32>
    %43 = vector.extract_strided_slice %17 {offsets = [48, 0], sizes = [8, 64], strides = [1, 1]} : vector<64x64xf32> to vector<8x64xf32>
    %cst_12 = arith.constant dense<0.000000e+00> : vector<8x64xf32>
    %44 = tpu.matmul %42, %2, %cst_12 {dimension_numbers = #tpu.dot_dimension_numbers<[1], [0], [0], [1], [0, 0, 1, 1], [], []>} : vector<8x64xf32>, vector<64x64xf32>, vector<8x64xf32> -> vector<8x64xf32>
    %45 = arith.addf %43, %44 : vector<8x64xf32>
    %46 = math.tanh %45 : vector<8x64xf32>
    %47 = vector.extract_strided_slice %17 {offsets = [56, 0], sizes = [8, 64], strides = [1, 1]} : vector<64x64xf32> to vector<8x64xf32>
    %cst_13 = arith.constant dense<0.000000e+00> : vector<8x64xf32>
    %48 = tpu.matmul %46, %2, %cst_13 {dimension_numbers = #tpu.dot_dimension_numbers<[1], [0], [0], [1], [0, 0, 1, 1], [], []>} : vector<8x64xf32>, vector<64x64xf32>, vector<8x64xf32> -> vector<8x64xf32>
    %49 = arith.addf %47, %48 : vector<8x64xf32>
    %50 = math.tanh %49 : vector<8x64xf32>
    %51 = tpu.concatenate %22, %26, %30, %34, %38, %42, %46, %50 in 0 : vector<8x64xf32>, vector<8x64xf32>, vector<8x64xf32>, vector<8x64xf32>, vector<8x64xf32>, vector<8x64xf32>, vector<8x64xf32>, vector<8x64xf32> -> vector<64x64xf32>
    %52 = vector.extract_strided_slice %51 {offsets = [56, 32], sizes = [8, 32], strides = [1, 1]} : vector<64x64xf32> to vector<8x32xf32>
    %53 = vector.extract_strided_slice %51 {offsets = [48, 32], sizes = [8, 32], strides = [1, 1]} : vector<64x64xf32> to vector<8x32xf32>
    %54 = vector.extract_strided_slice %51 {offsets = [40, 32], sizes = [8, 32], strides = [1, 1]} : vector<64x64xf32> to vector<8x32xf32>
    %55 = vector.extract_strided_slice %51 {offsets = [32, 32], sizes = [8, 32], strides = [1, 1]} : vector<64x64xf32> to vector<8x32xf32>
    %56 = vector.extract_strided_slice %51 {offsets = [24, 32], sizes = [8, 32], strides = [1, 1]} : vector<64x64xf32> to vector<8x32xf32>
    %57 = vector.extract_strided_slice %51 {offsets = [16, 32], sizes = [8, 32], strides = [1, 1]} : vector<64x64xf32> to vector<8x32xf32>
    %58 = vector.extract_strided_slice %51 {offsets = [8, 32], sizes = [8, 32], strides = [1, 1]} : vector<64x64xf32> to vector<8x32xf32>
    %59 = vector.extract_strided_slice %51 {offsets = [0, 32], sizes = [8, 32], strides = [1, 1]} : vector<64x64xf32> to vector<8x32xf32>
    %60 = tpu.concatenate %52, %53, %54, %55, %56, %57, %58, %59 in 0 : vector<8x32xf32>, vector<8x32xf32>, vector<8x32xf32>, vector<8x32xf32>, vector<8x32xf32>, vector<8x32xf32>, vector<8x32xf32>, vector<8x32xf32> -> vector<64x32xf32>
    %61 = vector.extract_strided_slice %51 {offsets = [0, 0], sizes = [64, 32], strides = [1, 1]} : vector<64x64xf32> to vector<64x32xf32>
    %62 = tpu.concatenate %61, %60 in 1 : vector<64x32xf32>, vector<64x32xf32> -> vector<64x64xf32>
    %c104 = arith.constant 104 : index
    %c0_14 = arith.constant 0 : index
    %63 = vector.load %arg1[%c104, %c0_14] : memref<256x64xf32, #tpu.memory_space<vmem>>, vector<64x64xf32>
    %c168 = arith.constant 168 : index
    %c0_15 = arith.constant 0 : index
    %64 = vector.load %arg1[%c168, %c0_15] : memref<256x64xf32, #tpu.memory_space<vmem>>, vector<64x64xf32>
    %c232 = arith.constant 232 : index
    %c0_16 = arith.constant 0 : index
    %65 = vector.load %arg1[%c232, %c0_16] : memref<256x64xf32, #tpu.memory_space<vmem>>, vector<1x64xf32>
    %cst_17 = arith.constant dense<0.000000e+00> : vector<64x64xf32>
    %66 = tpu.matmul %62, %63, %cst_17 {dimension_numbers = #tpu.dot_dimension_numbers<[1], [0], [0], [1], [0, 0, 1, 1], [], []>} : vector<64x64xf32>, vector<64x64xf32>, vector<64x64xf32> -> vector<64x64xf32>
    %67 = vector.broadcast %65 : vector<1x64xf32> to vector<64x64xf32>
    %68 = arith.addf %66, %67 : vector<64x64xf32>
    %69 = vector.extract_strided_slice %68 {offsets = [56, 32], sizes = [8, 32], strides = [1, 1]} : vector<64x64xf32> to vector<8x32xf32>
    %70 = vector.extract_strided_slice %68 {offsets = [48, 32], sizes = [8, 32], strides = [1, 1]} : vector<64x64xf32> to vector<8x32xf32>
    %71 = vector.extract_strided_slice %68 {offsets = [40, 32], sizes = [8, 32], strides = [1, 1]} : vector<64x64xf32> to vector<8x32xf32>
    %72 = vector.extract_strided_slice %68 {offsets = [32, 32], sizes = [8, 32], strides = [1, 1]} : vector<64x64xf32> to vector<8x32xf32>
    %73 = vector.extract_strided_slice %68 {offsets = [24, 32], sizes = [8, 32], strides = [1, 1]} : vector<64x64xf32> to vector<8x32xf32>
    %74 = vector.extract_strided_slice %68 {offsets = [16, 32], sizes = [8, 32], strides = [1, 1]} : vector<64x64xf32> to vector<8x32xf32>
    %75 = vector.extract_strided_slice %68 {offsets = [8, 32], sizes = [8, 32], strides = [1, 1]} : vector<64x64xf32> to vector<8x32xf32>
    %76 = vector.extract_strided_slice %68 {offsets = [0, 32], sizes = [8, 32], strides = [1, 1]} : vector<64x64xf32> to vector<8x32xf32>
    %77 = tpu.concatenate %69, %70, %71, %72, %73, %74, %75, %76 in 0 : vector<8x32xf32>, vector<8x32xf32>, vector<8x32xf32>, vector<8x32xf32>, vector<8x32xf32>, vector<8x32xf32>, vector<8x32xf32>, vector<8x32xf32> -> vector<64x32xf32>
    %78 = vector.extract_strided_slice %68 {offsets = [0, 0], sizes = [64, 32], strides = [1, 1]} : vector<64x64xf32> to vector<64x32xf32>
    %79 = tpu.concatenate %78, %77 in 1 : vector<64x32xf32>, vector<64x32xf32> -> vector<64x64xf32>
    %cst_18 = arith.constant 0.000000e+00 : f32
    %80 = vector.broadcast %cst_18 : f32 to vector<8x64xf32>
    %81 = vector.extract_strided_slice %79 {offsets = [0, 0], sizes = [8, 64], strides = [1, 1]} : vector<64x64xf32> to vector<8x64xf32>
    %cst_19 = arith.constant dense<0.000000e+00> : vector<8x64xf32>
    %82 = tpu.matmul %80, %64, %cst_19 {dimension_numbers = #tpu.dot_dimension_numbers<[1], [0], [0], [1], [0, 0, 1, 1], [], []>} : vector<8x64xf32>, vector<64x64xf32>, vector<8x64xf32> -> vector<8x64xf32>
    %83 = arith.addf %81, %82 : vector<8x64xf32>
    %84 = math.tanh %83 : vector<8x64xf32>
    %85 = vector.extract_strided_slice %79 {offsets = [8, 0], sizes = [8, 64], strides = [1, 1]} : vector<64x64xf32> to vector<8x64xf32>
    %cst_20 = arith.constant dense<0.000000e+00> : vector<8x64xf32>
    %86 = tpu.matmul %84, %64, %cst_20 {dimension_numbers = #tpu.dot_dimension_numbers<[1], [0], [0], [1], [0, 0, 1, 1], [], []>} : vector<8x64xf32>, vector<64x64xf32>, vector<8x64xf32> -> vector<8x64xf32>
    %87 = arith.addf %85, %86 : vector<8x64xf32>
    %88 = math.tanh %87 : vector<8x64xf32>
    %89 = vector.extract_strided_slice %79 {offsets = [16, 0], sizes = [8, 64], strides = [1, 1]} : vector<64x64xf32> to vector<8x64xf32>
    %cst_21 = arith.constant dense<0.000000e+00> : vector<8x64xf32>
    %90 = tpu.matmul %88, %64, %cst_21 {dimension_numbers = #tpu.dot_dimension_numbers<[1], [0], [0], [1], [0, 0, 1, 1], [], []>} : vector<8x64xf32>, vector<64x64xf32>, vector<8x64xf32> -> vector<8x64xf32>
    %91 = arith.addf %89, %90 : vector<8x64xf32>
    %92 = math.tanh %91 : vector<8x64xf32>
    %93 = vector.extract_strided_slice %79 {offsets = [24, 0], sizes = [8, 64], strides = [1, 1]} : vector<64x64xf32> to vector<8x64xf32>
    %cst_22 = arith.constant dense<0.000000e+00> : vector<8x64xf32>
    %94 = tpu.matmul %92, %64, %cst_22 {dimension_numbers = #tpu.dot_dimension_numbers<[1], [0], [0], [1], [0, 0, 1, 1], [], []>} : vector<8x64xf32>, vector<64x64xf32>, vector<8x64xf32> -> vector<8x64xf32>
    %95 = arith.addf %93, %94 : vector<8x64xf32>
    %96 = math.tanh %95 : vector<8x64xf32>
    %97 = vector.extract_strided_slice %79 {offsets = [32, 0], sizes = [8, 64], strides = [1, 1]} : vector<64x64xf32> to vector<8x64xf32>
    %cst_23 = arith.constant dense<0.000000e+00> : vector<8x64xf32>
    %98 = tpu.matmul %96, %64, %cst_23 {dimension_numbers = #tpu.dot_dimension_numbers<[1], [0], [0], [1], [0, 0, 1, 1], [], []>} : vector<8x64xf32>, vector<64x64xf32>, vector<8x64xf32> -> vector<8x64xf32>
    %99 = arith.addf %97, %98 : vector<8x64xf32>
    %100 = math.tanh %99 : vector<8x64xf32>
    %101 = vector.extract_strided_slice %79 {offsets = [40, 0], sizes = [8, 64], strides = [1, 1]} : vector<64x64xf32> to vector<8x64xf32>
    %cst_24 = arith.constant dense<0.000000e+00> : vector<8x64xf32>
    %102 = tpu.matmul %100, %64, %cst_24 {dimension_numbers = #tpu.dot_dimension_numbers<[1], [0], [0], [1], [0, 0, 1, 1], [], []>} : vector<8x64xf32>, vector<64x64xf32>, vector<8x64xf32> -> vector<8x64xf32>
    %103 = arith.addf %101, %102 : vector<8x64xf32>
    %104 = math.tanh %103 : vector<8x64xf32>
    %105 = vector.extract_strided_slice %79 {offsets = [48, 0], sizes = [8, 64], strides = [1, 1]} : vector<64x64xf32> to vector<8x64xf32>
    %cst_25 = arith.constant dense<0.000000e+00> : vector<8x64xf32>
    %106 = tpu.matmul %104, %64, %cst_25 {dimension_numbers = #tpu.dot_dimension_numbers<[1], [0], [0], [1], [0, 0, 1, 1], [], []>} : vector<8x64xf32>, vector<64x64xf32>, vector<8x64xf32> -> vector<8x64xf32>
    %107 = arith.addf %105, %106 : vector<8x64xf32>
    %108 = math.tanh %107 : vector<8x64xf32>
    %109 = vector.extract_strided_slice %79 {offsets = [56, 0], sizes = [8, 64], strides = [1, 1]} : vector<64x64xf32> to vector<8x64xf32>
    %cst_26 = arith.constant dense<0.000000e+00> : vector<8x64xf32>
    %110 = tpu.matmul %108, %64, %cst_26 {dimension_numbers = #tpu.dot_dimension_numbers<[1], [0], [0], [1], [0, 0, 1, 1], [], []>} : vector<8x64xf32>, vector<64x64xf32>, vector<8x64xf32> -> vector<8x64xf32>
    %111 = arith.addf %109, %110 : vector<8x64xf32>
    %112 = math.tanh %111 : vector<8x64xf32>
    %113 = tpu.concatenate %84, %88, %92, %96, %100, %104, %108, %112 in 0 : vector<8x64xf32>, vector<8x64xf32>, vector<8x64xf32>, vector<8x64xf32>, vector<8x64xf32>, vector<8x64xf32>, vector<8x64xf32>, vector<8x64xf32> -> vector<64x64xf32>
    %114 = vector.extract_strided_slice %113 {offsets = [56, 32], sizes = [8, 32], strides = [1, 1]} : vector<64x64xf32> to vector<8x32xf32>
    %115 = vector.extract_strided_slice %113 {offsets = [48, 32], sizes = [8, 32], strides = [1, 1]} : vector<64x64xf32> to vector<8x32xf32>
    %116 = vector.extract_strided_slice %113 {offsets = [40, 32], sizes = [8, 32], strides = [1, 1]} : vector<64x64xf32> to vector<8x32xf32>
    %117 = vector.extract_strided_slice %113 {offsets = [32, 32], sizes = [8, 32], strides = [1, 1]} : vector<64x64xf32> to vector<8x32xf32>
    %118 = vector.extract_strided_slice %113 {offsets = [24, 32], sizes = [8, 32], strides = [1, 1]} : vector<64x64xf32> to vector<8x32xf32>
    %119 = vector.extract_strided_slice %113 {offsets = [16, 32], sizes = [8, 32], strides = [1, 1]} : vector<64x64xf32> to vector<8x32xf32>
    %120 = vector.extract_strided_slice %113 {offsets = [8, 32], sizes = [8, 32], strides = [1, 1]} : vector<64x64xf32> to vector<8x32xf32>
    %121 = vector.extract_strided_slice %113 {offsets = [0, 32], sizes = [8, 32], strides = [1, 1]} : vector<64x64xf32> to vector<8x32xf32>
    %122 = tpu.concatenate %114, %115, %116, %117, %118, %119, %120, %121 in 0 : vector<8x32xf32>, vector<8x32xf32>, vector<8x32xf32>, vector<8x32xf32>, vector<8x32xf32>, vector<8x32xf32>, vector<8x32xf32>, vector<8x32xf32> -> vector<64x32xf32>
    %123 = vector.extract_strided_slice %113 {offsets = [0, 0], sizes = [64, 32], strides = [1, 1]} : vector<64x64xf32> to vector<64x32xf32>
    %124 = tpu.concatenate %123, %122 in 1 : vector<64x32xf32>, vector<64x32xf32> -> vector<64x64xf32>
    %c240 = arith.constant 240 : index
    %c0_27 = arith.constant 0 : index
    %125 = vector.load %arg1[%c240, %c0_27] : memref<256x64xf32, #tpu.memory_space<vmem>>, vector<1x64xf32>
    %c248 = arith.constant 248 : index
    %c0_28 = arith.constant 0 : index
    %126 = vector.load %arg1[%c248, %c0_28] : memref<256x64xf32, #tpu.memory_space<vmem>>, vector<1x64xf32>
    %127 = vector.extract_strided_slice %126 {offsets = [0, 0], sizes = [1, 1], strides = [1, 1]} : vector<1x64xf32> to vector<1x1xf32>
    %128 = vector.broadcast %125 : vector<1x64xf32> to vector<64x64xf32>
    %129 = arith.mulf %124, %128 : vector<64x64xf32>
    %cst_29 = arith.constant dense<0.000000e+00> : vector<64xf32>
    %130 = vector.multi_reduction <add>, %129, %cst_29 [1] : vector<64x64xf32> to vector<64xf32>
    %131 = vector.shape_cast %130 : vector<64xf32> to vector<64x1xf32>
    %132 = vector.broadcast %127 : vector<1x1xf32> to vector<64x1xf32>
    %133 = arith.addf %131, %132 : vector<64x1xf32>
    %134 = vector.extract_strided_slice %133 {offsets = [0, 0], sizes = [8, 1], strides = [1, 1]} : vector<64x1xf32> to vector<8x1xf32>
    %135 = vector.extract_strided_slice %133 {offsets = [8, 0], sizes = [8, 1], strides = [1, 1]} : vector<64x1xf32> to vector<8x1xf32>
    %136 = vector.extract_strided_slice %133 {offsets = [16, 0], sizes = [8, 1], strides = [1, 1]} : vector<64x1xf32> to vector<8x1xf32>
    %137 = vector.extract_strided_slice %133 {offsets = [24, 0], sizes = [8, 1], strides = [1, 1]} : vector<64x1xf32> to vector<8x1xf32>
    %138 = vector.extract_strided_slice %133 {offsets = [32, 0], sizes = [8, 1], strides = [1, 1]} : vector<64x1xf32> to vector<8x1xf32>
    %139 = vector.extract_strided_slice %133 {offsets = [40, 0], sizes = [8, 1], strides = [1, 1]} : vector<64x1xf32> to vector<8x1xf32>
    %140 = vector.extract_strided_slice %133 {offsets = [48, 0], sizes = [8, 1], strides = [1, 1]} : vector<64x1xf32> to vector<8x1xf32>
    %141 = vector.extract_strided_slice %133 {offsets = [56, 0], sizes = [8, 1], strides = [1, 1]} : vector<64x1xf32> to vector<8x1xf32>
    %142 = tpu.concatenate %134, %135, %136, %137, %138, %139, %140, %141 in 1 : vector<8x1xf32>, vector<8x1xf32>, vector<8x1xf32>, vector<8x1xf32>, vector<8x1xf32>, vector<8x1xf32>, vector<8x1xf32>, vector<8x1xf32> -> vector<8x8xf32>
    %143 = arith.negf %142 : vector<8x8xf32>
    %144 = math.exp %143 : vector<8x8xf32>
    %cst_30 = arith.constant 1.000000e+00 : f32
    %145 = vector.broadcast %cst_30 : f32 to vector<8x8xf32>
    %146 = arith.addf %145, %144 : vector<8x8xf32>
    %147 = arith.divf %145, %146 : vector<8x8xf32>
    %c0_31 = arith.constant 0 : index
    %c0_32 = arith.constant 0 : index
    %148 = vector.load %arg2[%c0_31, %c0_32] : memref<8x8xf32, #tpu.memory_space<vmem>>, vector<8x8xf32>
    tpu.vector_store %arg2[%c0_31, %c0_32], %147 {strides = array<i32>} : memref<8x8xf32, #tpu.memory_space<vmem>>, vector<8x8xf32>,
    return
  }
}

</mosaic_0001>

<llo_original>
// kernel: _lambda_.1
$region0: #{_lambda_.1}
  #allocation0 [shape = 'u32[]', space=smem, size = 0x4, offset = 0x4, fixed_abs, tag = 'smem constant byte address 0x4 - core index']
  #allocation1 [shape = 'u32[144,128]{1,0:T(1,128)}', space=vmem, size = 0x12000, scoped, tag = 'internal scratch']
  %s0 = inlined_call_operand.vmem [shape: f32[64,32], index: 0, kind: input, shape index: {}]
  %s1 = inlined_call_operand.vmem [shape: f32[256,64], index: 1, kind: input, shape index: {}]
  %s2 = inlined_call_operand.vmem [shape: f32[8,8], index: 2, kind: output, shape index: {}]
  %s3 = sld [smem:[#allocation0]]
  $region18: #{_lambda_.1} parent=0
    _
  %s5 = ssub.s32 1, %s3
  %s6 = scalar_select 0, %s5, %s3
  // Predicated region
  $region2: #{_lambda_.1} parent=0 // pred_check
    _
  $region3: #{_lambda_.1} parent=0 // pred_check_branch
    %8 = sbr.rel (0) target = $region5
  $region4: #{_lambda_.1} parent=0 // pred_region
    _
  $region5: #{_lambda_.1} parent=0 // pred_fallthru
    _
  // Predicated region
  $region6: #{_lambda_.1} parent=0 // pred_check
    _
  $region7: #{_lambda_.1} parent=0 // pred_check_branch
    %10 = sbr.rel (0) target = $region9
  $region8: #{_lambda_.1} parent=0 // pred_region
    _
  $region9: #{_lambda_.1} parent=0 // pred_fallthru
    _
  %v11 = vld [vmem:[%s0] sm:$0xff]
  %v12 = vld [vmem:[%s0 + $0x8] sm:$0xff]
  %v13 = vld [vmem:[%s0 + $0x10] sm:$0xff]
  %v14 = vld [vmem:[%s0 + $0x18] sm:$0xff]
  %v15 = vld [vmem:[%s0 + $0x20] sm:$0xff]
  %v16 = vld [vmem:[%s0 + $0x28] sm:$0xff]
  %v17 = vld [vmem:[%s0 + $0x30] sm:$0xff]
  %v18 = vld [vmem:[%s0 + $0x38] sm:$0xff]
  %v19 = vld [vmem:[%s1] sm:$0xff]
  %v20 = vld [vmem:[%s1 + $0x8] sm:$0xff]
  %v21 = vld [vmem:[%s1 + $0x10] sm:$0xff]
  %v22 = vld [vmem:[%s1 + $0x18] sm:$0xff]
  %v23 = vld [vmem:[%s1 + $0x20] sm:$0xff]
  %v24 = vld [vmem:[%s1 + $0x28] sm:$0xff]
  %v25 = vld [vmem:[%s1 + $0x30] sm:$0xff]
  %v26 = vld [vmem:[%s1 + $0x38] sm:$0xff]
  %v27 = vld [vmem:[%s1 + $0x40] sm:$0xff]
  %v28 = vld [vmem:[%s1 + $0x48] sm:$0xff]
  %v29 = vld [vmem:[%s1 + $0x50] sm:$0xff]
  %v30 = vld [vmem:[%s1 + $0x58] sm:$0xff]
  %v31 = vld [vmem:[%s1 + $0x60] sm:$0x1]
  %v32 = vlaneseq
  %v33 = vshrl.u32 %v32, 7
  %v34 = vsub.s32 0, %v33
  %v35 = vrot.slane %v31, %v34
  %vm36 = vcmask 261120
  %v38 = vsel %vm36, %v11, 0
  %v41 = vsel %vm36, %v12, 0
  %v44 = vsel %vm36, %v13, 0
  %v47 = vsel %vm36, %v14, 0
  %v50 = vsel %vm36, %v15, 0
  %v53 = vsel %vm36, %v16, 0
  %v56 = vsel %vm36, %v17, 0
  %v59 = vsel %vm36, %v18, 0
  %61 = vmatprep.subr.mxu0 0.0
  %62 = vmatpush1.msra.mxu0 0.0
  %63 = vmatprep.subr.mxu0 0.0
  %64 = vmatpush1.msra.mxu0 0.0
  %65 = vmatprep.subr.mxu0 0.0
  %66 = vmatpush1.msra.mxu0 0.0
  %67 = vmatprep.subr.mxu0 0.0
  %68 = vmatpush1.msra.mxu0 0.0
  %69 = vmatprep.subr.mxu0 0.0
  %70 = vmatpush1.msra.mxu0 0.0
  %71 = vmatprep.subr.mxu0 0.0
  %72 = vmatpush1.msra.mxu0 0.0
  %73 = vmatprep.subr.mxu0 0.0
  %74 = vmatpush1.msra.mxu0 0.0
  %75 = vmatprep.subr.mxu0 0.0
  %76 = vmatpush1.msra.mxu0 0.0
  %77 = vmatprep.subr.mxu0 0.0
  %78 = vmatpush1.msra.mxu0 0.0
  %79 = vmatprep.subr.mxu0 0.0
  %80 = vmatpush1.msra.mxu0 0.0
  %81 = vmatprep.subr.mxu0 0.0
  %82 = vmatpush1.msra.mxu0 0.0
  %83 = vmatprep.subr.mxu0 0.0
  %84 = vmatpush1.msra.mxu0 0.0
  %85 = vmatprep.subr.mxu0 0.0
  %86 = vmatpush1.msra.mxu0 %v22
  %87 = vmatprep.subr.mxu0 0.0
  %88 = vmatpush1.msra.mxu0 %v21
  %89 = vmatprep.subr.mxu0 0.0
  %90 = vmatpush1.msra.mxu0 %v20
  %91 = vmatprep.subr.mxu0 0.0
  %92 = vmatpush1.msra.mxu0 %v19
  %93 = vmatprep.subr.mxu0 0.0
  %94 = vmatpush2.msra.mxu0 0.0
  %95 = vmatprep.subr.mxu0 0.0
  %96 = vmatpush2.msra.mxu0 0.0
  %97 = vmatprep.subr.mxu0 0.0
  %98 = vmatpush2.msra.mxu0 0.0
  %99 = vmatprep.subr.mxu0 0.0
  %100 = vmatpush2.msra.mxu0 0.0
  %101 = vmatprep.subr.mxu0 0.0
  %102 = vmatpush2.msra.mxu0 0.0
  %103 = vmatprep.subr.mxu0 0.0
  %104 = vmatpush2.msra.mxu0 0.0
  %105 = vmatprep.subr.mxu0 0.0
  %106 = vmatpush2.msra.mxu0 0.0
  %107 = vmatprep.subr.mxu0 0.0
  %108 = vmatpush2.msra.mxu0 0.0
  %109 = vmatprep.subr.mxu0 0.0
  %110 = vmatpush2.msra.mxu0 0.0
  %111 = vmatprep.subr.mxu0 0.0
  %112 = vmatpush2.msra.mxu0 0.0
  %113 = vmatprep.subr.mxu0 0.0
  %114 = vmatpush2.msra.mxu0 0.0
  %115 = vmatprep.subr.mxu0 0.0
  %116 = vmatpush2.msra.mxu0 0.0
  %117 = vmatprep.subr.mxu0 0.0
  %118 = vmatpush2.msra.mxu0 0.0
  %119 = vmatprep.subr.mxu0 0.0
  %120 = vmatpush2.msra.mxu0 0.0
  %121 = vmatprep.subr.mxu0 0.0
  %122 = vmatpush2.msra.mxu0 0.0
  %123 = vmatprep.subr.mxu0 0.0
  %124 = vmatpush2.msra.mxu0 0.0
  %125 = vmatprep.mubr.f32.mxu0 0.0
  %126 = vmatmul.mubr.f32.gmra.mxu0 %v38
  %v127 = vpop.f32.mrf.mxu0
  %v128 = vadd.f32 %v35, %v127
  %v129 = vpop.f32.mrf.mxu0
  %130 = vmatprep.mubr.f32.mxu0 0.0
  %131 = vmatmul.mubr.f32.gmra.mxu0 %v41
  %v132 = vpop.f32.mrf.mxu0
  %v133 = vadd.f32 %v35, %v132
  %v134 = vpop.f32.mrf.mxu0
  %135 = vmatprep.mubr.f32.mxu0 0.0
  %136 = vmatmul.mubr.f32.gmra.mxu0 %v44
  %v137 = vpop.f32.mrf.mxu0
  %v138 = vadd.f32 %v35, %v137
  %v139 = vpop.f32.mrf.mxu0
  %140 = vmatprep.mubr.f32.mxu0 0.0
  %141 = vmatmul.mubr.f32.gmra.mxu0 %v47
  %v142 = vpop.f32.mrf.mxu0
  %v143 = vadd.f32 %v35, %v142
  %v144 = vpop.f32.mrf.mxu0
  %145 = vmatprep.mubr.f32.mxu0 0.0
  %146 = vmatmul.mubr.f32.gmra.mxu0 %v50
  %v147 = vpop.f32.mrf.mxu0
  %v148 = vadd.f32 %v35, %v147
  %v149 = vpop.f32.mrf.mxu0
  %150 = vmatprep.mubr.f32.mxu0 0.0
  %151 = vmatmul.mubr.f32.gmra.mxu0 %v53
  %v152 = vpop.f32.mrf.mxu0
  %v153 = vadd.f32 %v35, %v152
  %v154 = vpop.f32.mrf.mxu0
  %155 = vmatprep.mubr.f32.mxu0 0.0
  %156 = vmatmul.mubr.f32.gmra.mxu0 %v56
  %v157 = vpop.f32.mrf.mxu0
  %v158 = vadd.f32 %v35, %v157
  %v159 = vpop.f32.mrf.mxu0
  %160 = vmatprep.mubr.f32.mxu0 0.0
  %161 = vmatmul.mubr.f32.gmra.mxu0 %v59
  %v162 = vpop.f32.mrf.mxu0
  %v163 = vadd.f32 %v35, %v162
  %v164 = vpop.f32.mrf.mxu0
  %165 = vdwg.mxu0
  %v166 = vsel %vm36, %v128, %v163
  %v167 = vsel %vm36, %v133, %v158
  %v168 = vsel %vm36, %v138, %v153
  %v169 = vsel %vm36, %v143, %v148
  %v170 = vsel %vm36, %v148, %v143
  %v171 = vsel %vm36, %v153, %v138
  %v172 = vsel %vm36, %v158, %v133
  %v173 = vsel %vm36, %v163, %v128
  %vm174 = vcmask 523264
  %v176 = vsel %vm174, 0.0, 0
  %178 = vmatprep.subr.mxu0 0.0
  %179 = vmatpush1.msra.mxu0 0.0
  %180 = vmatprep.subr.mxu0 0.0
  %181 = vmatpush1.msra.mxu0 0.0
  %182 = vmatprep.subr.mxu0 0.0
  %183 = vmatpush1.msra.mxu0 0.0
  %184 = vmatprep.subr.mxu0 0.0
  %185 = vmatpush1.msra.mxu0 0.0
  %186 = vmatprep.subr.mxu0 0.0
  %187 = vmatpush1.msra.mxu0 0.0
  %188 = vmatprep.subr.mxu0 0.0
  %189 = vmatpush1.msra.mxu0 0.0
  %190 = vmatprep.subr.mxu0 0.0
  %191 = vmatpush1.msra.mxu0 0.0
  %192 = vmatprep.subr.mxu0 0.0
  %193 = vmatpush1.msra.mxu0 0.0
  %194 = vmatprep.subr.mxu0 0.0
  %195 = vmatpush1.msra.mxu0 %v30
  %196 = vmatprep.subr.mxu0 0.0
  %197 = vmatpush1.msra.mxu0 %v29
  %198 = vmatprep.subr.mxu0 0.0
  %199 = vmatpush1.msra.mxu0 %v28
  %200 = vmatprep.subr.mxu0 0.0
  %201 = vmatpush1.msra.mxu0 %v27
  %202 = vmatprep.subr.mxu0 0.0
  %203 = vmatpush1.msra.mxu0 %v26
  %204 = vmatprep.subr.mxu0 0.0
  %205 = vmatpush1.msra.mxu0 %v25
  %206 = vmatprep.subr.mxu0 0.0
  %207 = vmatpush1.msra.mxu0 %v24
  %208 = vmatprep.subr.mxu0 0.0
  %209 = vmatpush1.msra.mxu0 %v23
  %210 = vmatprep.subr.mxu0 0.0
  %211 = vmatpush2.msra.mxu0 0.0
  %212 = vmatprep.subr.mxu0 0.0
  %213 = vmatpush2.msra.mxu0 0.0
  %214 = vmatprep.subr.mxu0 0.0
  %215 = vmatpush2.msra.mxu0 0.0
  %216 = vmatprep.subr.mxu0 0.0
  %217 = vmatpush2.msra.mxu0 0.0
  %218 = vmatprep.subr.mxu0 0.0
  %219 = vmatpush2.msra.mxu0 0.0
  %220 = vmatprep.subr.mxu0 0.0
  %221 = vmatpush2.msra.mxu0 0.0
  %222 = vmatprep.subr.mxu0 0.0
  %223 = vmatpush2.msra.mxu0 0.0
  %224 = vmatprep.subr.mxu0 0.0
  %225 = vmatpush2.msra.mxu0 0.0
  %226 = vmatprep.subr.mxu0 0.0
  %227 = vmatpush2.msra.mxu0 0.0
  %228 = vmatprep.subr.mxu0 0.0
  %229 = vmatpush2.msra.mxu0 0.0
  %230 = vmatprep.subr.mxu0 0.0
  %231 = vmatpush2.msra.mxu0 0.0
  %232 = vmatprep.subr.mxu0 0.0
  %233 = vmatpush2.msra.mxu0 0.0
  %234 = vmatprep.subr.mxu0 0.0
  %235 = vmatpush2.msra.mxu0 0.0
  %236 = vmatprep.subr.mxu0 0.0
  %237 = vmatpush2.msra.mxu0 0.0
  %238 = vmatprep.subr.mxu0 0.0
  %239 = vmatpush2.msra.mxu0 0.0
  %240 = vmatprep.subr.mxu0 0.0
  %241 = vmatpush2.msra.mxu0 0.0
  %242 = vmatprep.mubr.f32.mxu0 0.0
  %243 = vmatmul.mubr.f32.gmra.mxu0 %v176
  %v244 = vpop.f32.mrf.mxu0
  %v245 = vadd.f32 0.0, %v244
  %v246 = vpop.f32.mrf.mxu0
  %247 = vdwg.mxu0
  %v248 = vadd.f32 %v166, %v245
  %v249 = vtanh.pop %v248
  %v251 = vsel %vm174, %v249, 0
  %253 = vmatprep.subr.mxu0 0.0
  %254 = vmatpush1.msra.mxu0 0.0
  %255 = vmatprep.subr.mxu0 0.0
  %256 = vmatpush1.msra.mxu0 0.0
  %257 = vmatprep.subr.mxu0 0.0
  %258 = vmatpush1.msra.mxu0 0.0
  %259 = vmatprep.subr.mxu0 0.0
  %260 = vmatpush1.msra.mxu0 0.0
  %261 = vmatprep.subr.mxu0 0.0
  %262 = vmatpush1.msra.mxu0 0.0
  %263 = vmatprep.subr.mxu0 0.0
  %264 = vmatpush1.msra.mxu0 0.0
  %265 = vmatprep.subr.mxu0 0.0
  %266 = vmatpush1.msra.mxu0 0.0
  %267 = vmatprep.subr.mxu0 0.0
  %268 = vmatpush1.msra.mxu0 0.0
  %269 = vmatprep.subr.mxu0 0.0
  %270 = vmatpush1.msra.mxu0 %v30
  %271 = vmatprep.subr.mxu0 0.0
  %272 = vmatpush1.msra.mxu0 %v29
  %273 = vmatprep.subr.mxu0 0.0
  %274 = vmatpush1.msra.mxu0 %v28
  %275 = vmatprep.subr.mxu0 0.0
  %276 = vmatpush1.msra.mxu0 %v27
  %277 = vmatprep.subr.mxu0 0.0
  %278 = vmatpush1.msra.mxu0 %v26
  %279 = vmatprep.subr.mxu0 0.0
  %280 = vmatpush1.msra.mxu0 %v25
  %281 = vmatprep.subr.mxu0 0.0
  %282 = vmatpush1.msra.mxu0 %v24
  %283 = vmatprep.subr.mxu0 0.0
  %284 = vmatpush1.msra.mxu0 %v23
  %285 = vmatprep.subr.mxu0 0.0
  %286 = vmatpush2.msra.mxu0 0.0
  %287 = vmatprep.subr.mxu0 0.0
  %288 = vmatpush2.msra.mxu0 0.0
  %289 = vmatprep.subr.mxu0 0.0
  %290 = vmatpush2.msra.mxu0 0.0
  %291 = vmatprep.subr.mxu0 0.0
  %292 = vmatpush2.msra.mxu0 0.0
  %293 = vmatprep.subr.mxu0 0.0
  %294 = vmatpush2.msra.mxu0 0.0
  %295 = vmatprep.subr.mxu0 0.0
  %296 = vmatpush2.msra.mxu0 0.0
  %297 = vmatprep.subr.mxu0 0.0
  %298 = vmatpush2.msra.mxu0 0.0
  %299 = vmatprep.subr.mxu0 0.0
  %300 = vmatpush2.msra.mxu0 0.0
  %301 = vmatprep.subr.mxu0 0.0
  %302 = vmatpush2.msra.mxu0 0.0
  %303 = vmatprep.subr.mxu0 0.0
  %304 = vmatpush2.msra.mxu0 0.0
  %305 = vmatprep.subr.mxu0 0.0
  %306 = vmatpush2.msra.mxu0 0.0
  %307 = vmatprep.subr.mxu0 0.0
  %308 = vmatpush2.msra.mxu0 0.0
  %309 = vmatprep.subr.mxu0 0.0
  %310 = vmatpush2.msra.mxu0 0.0
  %311 = vmatprep.subr.mxu0 0.0
  %312 = vmatpush2.msra.mxu0 0.0
  %313 = vmatprep.subr.mxu0 0.0
  %314 = vmatpush2.msra.mxu0 0.0
  %315 = vmatprep.subr.mxu0 0.0
  %316 = vmatpush2.msra.mxu0 0.0
  %317 = vmatprep.mubr.f32.mxu0 0.0
  %318 = vmatmul.mubr.f32.gmra.mxu0 %v251
  %v319 = vpop.f32.mrf.mxu0
  %v320 = vadd.f32 0.0, %v319
  %v321 = vpop.f32.mrf.mxu0
  %322 = vdwg.mxu0
  %v323 = vadd.f32 %v167, %v320
  %v324 = vtanh.pop %v323
  %v326 = vsel %vm174, %v324, 0
  %328 = vmatprep.subr.mxu0 0.0
  %329 = vmatpush1.msra.mxu0 0.0
  %330 = vmatprep.subr.mxu0 0.0
  %331 = vmatpush1.msra.mxu0 0.0
  %332 = vmatprep.subr.mxu0 0.0
  %333 = vmatpush1.msra.mxu0 0.0
  %334 = vmatprep.subr.mxu0 0.0
  %335 = vmatpush1.msra.mxu0 0.0
  %336 = vmatprep.subr.mxu0 0.0
  %337 = vmatpush1.msra.mxu0 0.0
  %338 = vmatprep.subr.mxu0 0.0
  %339 = vmatpush1.msra.mxu0 0.0
  %340 = vmatprep.subr.mxu0 0.0
  %341 = vmatpush1.msra.mxu0 0.0
  %342 = vmatprep.subr.mxu0 0.0
  %343 = vmatpush1.msra.mxu0 0.0
  %344 = vmatprep.subr.mxu0 0.0
  %345 = vmatpush1.msra.mxu0 %v30
  %346 = vmatprep.subr.mxu0 0.0
  %347 = vmatpush1.msra.mxu0 %v29
  %348 = vmatprep.subr.mxu0 0.0
  %349 = vmatpush1.msra.mxu0 %v28
  %350 = vmatprep.subr.mxu0 0.0
  %351 = vmatpush1.msra.mxu0 %v27
  %352 = vmatprep.subr.mxu0 0.0
  %353 = vmatpush1.msra.mxu0 %v26
  %354 = vmatprep.subr.mxu0 0.0
  %355 = vmatpush1.msra.mxu0 %v25
  %356 = vmatprep.subr.mxu0 0.0
  %357 = vmatpush1.msra.mxu0 %v24
  %358 = vmatprep.subr.mxu0 0.0
  %359 = vmatpush1.msra.mxu0 %v23
  %360 = vmatprep.subr.mxu0 0.0
  %361 = vmatpush2.msra.mxu0 0.0
  %362 = vmatprep.subr.mxu0 0.0
  %363 = vmatpush2.msra.mxu0 0.0
  %364 = vmatprep.subr.mxu0 0.0
  %365 = vmatpush2.msra.mxu0 0.0
  %366 = vmatprep.subr.mxu0 0.0
  %367 = vmatpush2.msra.mxu0 0.0
  %368 = vmatprep.subr.mxu0 0.0
  %369 = vmatpush2.msra.mxu0 0.0
  %370 = vmatprep.subr.mxu0 0.0
  %371 = vmatpush2.msra.mxu0 0.0
  %372 = vmatprep.subr.mxu0 0.0
  %373 = vmatpush2.msra.mxu0 0.0
  %374 = vmatprep.subr.mxu0 0.0
  %375 = vmatpush2.msra.mxu0 0.0
  %376 = vmatprep.subr.mxu0 0.0
  %377 = vmatpush2.msra.mxu0 0.0
  %378 = vmatprep.subr.mxu0 0.0
  %379 = vmatpush2.msra.mxu0 0.0
  %380 = vmatprep.subr.mxu0 0.0
  %381 = vmatpush2.msra.mxu0 0.0
  %382 = vmatprep.subr.mxu0 0.0
  %383 = vmatpush2.msra.mxu0 0.0
  %384 = vmatprep.subr.mxu0 0.0
  %385 = vmatpush2.msra.mxu0 0.0
  %386 = vmatprep.subr.mxu0 0.0
  %387 = vmatpush2.msra.mxu0 0.0
  %388 = vmatprep.subr.mxu0 0.0
  %389 = vmatpush2.msra.mxu0 0.0
  %390 = vmatprep.subr.mxu0 0.0
  %391 = vmatpush2.msra.mxu0 0.0
  %392 = vmatprep.mubr.f32.mxu0 0.0
  %393 = vmatmul.mubr.f32.gmra.mxu0 %v326
  %v394 = vpop.f32.mrf.mxu0
  %v395 = vadd.f32 0.0, %v394
  %v396 = vpop.f32.mrf.mxu0
  %397 = vdwg.mxu0
  %v398 = vadd.f32 %v168, %v395
  %v399 = vtanh.pop %v398
  %v401 = vsel %vm174, %v399, 0
  %403 = vmatprep.subr.mxu0 0.0
  %404 = vmatpush1.msra.mxu0 0.0
  %405 = vmatprep.subr.mxu0 0.0
  %406 = vmatpush1.msra.mxu0 0.0
  %407 = vmatprep.subr.mxu0 0.0
  %408 = vmatpush1.msra.mxu0 0.0
  %409 = vmatprep.subr.mxu0 0.0
  %410 = vmatpush1.msra.mxu0 0.0
  %411 = vmatprep.subr.mxu0 0.0
  %412 = vmatpush1.msra.mxu0 0.0
  %413 = vmatprep.subr.mxu0 0.0
  %414 = vmatpush1.msra.mxu0 0.0
  %415 = vmatprep.subr.mxu0 0.0
  %416 = vmatpush1.msra.mxu0 0.0
  %417 = vmatprep.subr.mxu0 0.0
  %418 = vmatpush1.msra.mxu0 0.0
  %419 = vmatprep.subr.mxu0 0.0
  %420 = vmatpush1.msra.mxu0 %v30
  %421 = vmatprep.subr.mxu0 0.0
  %422 = vmatpush1.msra.mxu0 %v29
  %423 = vmatprep.subr.mxu0 0.0
  %424 = vmatpush1.msra.mxu0 %v28
  %425 = vmatprep.subr.mxu0 0.0
  %426 = vmatpush1.msra.mxu0 %v27
  %427 = vmatprep.subr.mxu0 0.0
  %428 = vmatpush1.msra.mxu0 %v26
  %429 = vmatprep.subr.mxu0 0.0
  %430 = vmatpush1.msra.mxu0 %v25
  %431 = vmatprep.subr.mxu0 0.0
  %432 = vmatpush1.msra.mxu0 %v24
  %433 = vmatprep.subr.mxu0 0.0
  %434 = vmatpush1.msra.mxu0 %v23
  %435 = vmatprep.subr.mxu0 0.0
  %436 = vmatpush2.msra.mxu0 0.0
  %437 = vmatprep.subr.mxu0 0.0
  %438 = vmatpush2.msra.mxu0 0.0
  %439 = vmatprep.subr.mxu0 0.0
  %440 = vmatpush2.msra.mxu0 0.0
  %441 = vmatprep.subr.mxu0 0.0
  %442 = vmatpush2.msra.mxu0 0.0
  %443 = vmatprep.subr.mxu0 0.0
  %444 = vmatpush2.msra.mxu0 0.0
  %445 = vmatprep.subr.mxu0 0.0
  %446 = vmatpush2.msra.mxu0 0.0
  %447 = vmatprep.subr.mxu0 0.0
  %448 = vmatpush2.msra.mxu0 0.0
  %449 = vmatprep.subr.mxu0 0.0
  %450 = vmatpush2.msra.mxu0 0.0
  %451 = vmatprep.subr.mxu0 0.0
  %452 = vmatpush2.msra.mxu0 0.0
  %453 = vmatprep.subr.mxu0 0.0
  %454 = vmatpush2.msra.mxu0 0.0
  %455 = vmatprep.subr.mxu0 0.0
  %456 = vmatpush2.msra.mxu0 0.0
  %457 = vmatprep.subr.mxu0 0.0
  %458 = vmatpush2.msra.mxu0 0.0
  %459 = vmatprep.subr.mxu0 0.0
  %460 = vmatpush2.msra.mxu0 0.0
  %461 = vmatprep.subr.mxu0 0.0
  %462 = vmatpush2.msra.mxu0 0.0
  %463 = vmatprep.subr.mxu0 0.0
  %464 = vmatpush2.msra.mxu0 0.0
  %465 = vmatprep.subr.mxu0 0.0
  %466 = vmatpush2.msra.mxu0 0.0
  %467 = vmatprep.mubr.f32.mxu0 0.0
  %468 = vmatmul.mubr.f32.gmra.mxu0 %v401
  %v469 = vpop.f32.mrf.mxu0
  %v470 = vadd.f32 0.0, %v469
  %v471 = vpop.f32.mrf.mxu0
  %472 = vdwg.mxu0
  %v473 = vadd.f32 %v169, %v470
  %v474 = vtanh.pop %v473
  %v476 = vsel %vm174, %v474, 0
  %478 = vmatprep.subr.mxu0 0.0
  %479 = vmatpush1.msra.mxu0 0.0
  %480 = vmatprep.subr.mxu0 0.0
  %481 = vmatpush1.msra.mxu0 0.0
  %482 = vmatprep.subr.mxu0 0.0
  %483 = vmatpush1.msra.mxu0 0.0
  %484 = vmatprep.subr.mxu0 0.0
  %485 = vmatpush1.msra.mxu0 0.0
  %486 = vmatprep.subr.mxu0 0.0
  %487 = vmatpush1.msra.mxu0 0.0
  %488 = vmatprep.subr.mxu0 0.0
  %489 = vmatpush1.msra.mxu0 0.0
  %490 = vmatprep.subr.mxu0 0.0
  %491 = vmatpush1.msra.mxu0 0.0
  %492 = vmatprep.subr.mxu0 0.0
  %493 = vmatpush1.msra.mxu0 0.0
  %494 = vmatprep.subr.mxu0 0.0
  %495 = vmatpush1.msra.mxu0 %v30
  %496 = vmatprep.subr.mxu0 0.0
  %497 = vmatpush1.msra.mxu0 %v29
  %498 = vmatprep.subr.mxu0 0.0
  %499 = vmatpush1.msra.mxu0 %v28
  %500 = vmatprep.subr.mxu0 0.0
  %501 = vmatpush1.msra.mxu0 %v27
  %502 = vmatprep.subr.mxu0 0.0
  %503 = vmatpush1.msra.mxu0 %v26
  %504 = vmatprep.subr.mxu0 0.0
  %505 = vmatpush1.msra.mxu0 %v25
  %506 = vmatprep.subr.mxu0 0.0
  %507 = vmatpush1.msra.mxu0 %v24
  %508 = vmatprep.subr.mxu0 0.0
  %509 = vmatpush1.msra.mxu0 %v23
  %510 = vmatprep.subr.mxu0 0.0
  %511 = vmatpush2.msra.mxu0 0.0
  %512 = vmatprep.subr.mxu0 0.0
  %513 = vmatpush2.msra.mxu0 0.0
  %514 = vmatprep.subr.mxu0 0.0
  %515 = vmatpush2.msra.mxu0 0.0
  %516 = vmatprep.subr.mxu0 0.0
  %517 = vmatpush2.msra.mxu0 0.0
  %518 = vmatprep.subr.mxu0 0.0
  %519 = vmatpush2.msra.mxu0 0.0
  %520 = vmatprep.subr.mxu0 0.0
  %521 = vmatpush2.msra.mxu0 0.0
  %522 = vmatprep.subr.mxu0 0.0
  %523 = vmatpush2.msra.mxu0 0.0
  %524 = vmatprep.subr.mxu0 0.0
  %525 = vmatpush2.msra.mxu0 0.0
  %526 = vmatprep.subr.mxu0 0.0
  %527 = vmatpush2.msra.mxu0 0.0
  %528 = vmatprep.subr.mxu0 0.0
  %529 = vmatpush2.msra.mxu0 0.0
  %530 = vmatprep.subr.mxu0 0.0
  %531 = vmatpush2.msra.mxu0 0.0
  %532 = vmatprep.subr.mxu0 0.0
  %533 = vmatpush2.msra.mxu0 0.0
  %534 = vmatprep.subr.mxu0 0.0
  %535 = vmatpush2.msra.mxu0 0.0
  %536 = vmatprep.subr.mxu0 0.0
  %537 = vmatpush2.msra.mxu0 0.0
  %538 = vmatprep.subr.mxu0 0.0
  %539 = vmatpush2.msra.mxu0 0.0
  %540 = vmatprep.subr.mxu0 0.0
  %541 = vmatpush2.msra.mxu0 0.0
  %542 = vmatprep.mubr.f32.mxu0 0.0
  %543 = vmatmul.mubr.f32.gmra.mxu0 %v476
  %v544 = vpop.f32.mrf.mxu0
  %v545 = vadd.f32 0.0, %v544
  %v546 = vpop.f32.mrf.mxu0
  %547 = vdwg.mxu0
  %v548 = vadd.f32 %v170, %v545
  %v549 = vtanh.pop %v548
  %v551 = vsel %vm174, %v549, 0
  %553 = vmatprep.subr.mxu0 0.0
  %554 = vmatpush1.msra.mxu0 0.0
  %555 = vmatprep.subr.mxu0 0.0
  %556 = vmatpush1.msra.mxu0 0.0
  %557 = vmatprep.subr.mxu0 0.0
  %558 = vmatpush1.msra.mxu0 0.0
  %559 = vmatprep.subr.mxu0 0.0
  %560 = vmatpush1.msra.mxu0 0.0
  %561 = vmatprep.subr.mxu0 0.0
  %562 = vmatpush1.msra.mxu0 0.0
  %563 = vmatprep.subr.mxu0 0.0
  %564 = vmatpush1.msra.mxu0 0.0
  %565 = vmatprep.subr.mxu0 0.0
  %566 = vmatpush1.msra.mxu0 0.0
  %567 = vmatprep.subr.mxu0 0.0
  %568 = vmatpush1.msra.mxu0 0.0
  %569 = vmatprep.subr.mxu0 0.0
  %570 = vmatpush1.msra.mxu0 %v30
  %571 = vmatprep.subr.mxu0 0.0
  %572 = vmatpush1.msra.mxu0 %v29
  %573 = vmatprep.subr.mxu0 0.0
  %574 = vmatpush1.msra.mxu0 %v28
  %575 = vmatprep.subr.mxu0 0.0
  %576 = vmatpush1.msra.mxu0 %v27
  %577 = vmatprep.subr.mxu0 0.0
  %578 = vmatpush1.msra.mxu0 %v26
  %579 = vmatprep.subr.mxu0 0.0
  %580 = vmatpush1.msra.mxu0 %v25
  %581 = vmatprep.subr.mxu0 0.0
  %582 = vmatpush1.msra.mxu0 %v24
  %583 = vmatprep.subr.mxu0 0.0
  %584 = vmatpush1.msra.mxu0 %v23
  %585 = vmatprep.subr.mxu0 0.0
  %586 = vmatpush2.msra.mxu0 0.0
  %587 = vmatprep.subr.mxu0 0.0
  %588 = vmatpush2.msra.mxu0 0.0
  %589 = vmatprep.subr.mxu0 0.0
  %590 = vmatpush2.msra.mxu0 0.0
  %591 = vmatprep.subr.mxu0 0.0
  %592 = vmatpush2.msra.mxu0 0.0
  %593 = vmatprep.subr.mxu0 0.0
  %594 = vmatpush2.msra.mxu0 0.0
  %595 = vmatprep.subr.mxu0 0.0
  %596 = vmatpush2.msra.mxu0 0.0
  %597 = vmatprep.subr.mxu0 0.0
  %598 = vmatpush2.msra.mxu0 0.0
  %599 = vmatprep.subr.mxu0 0.0
  %600 = vmatpush2.msra.mxu0 0.0
  %601 = vmatprep.subr.mxu0 0.0
  %602 = vmatpush2.msra.mxu0 0.0
  %603 = vmatprep.subr.mxu0 0.0
  %604 = vmatpush2.msra.mxu0 0.0
  %605 = vmatprep.subr.mxu0 0.0
  %606 = vmatpush2.msra.mxu0 0.0
  %607 = vmatprep.subr.mxu0 0.0
  %608 = vmatpush2.msra.mxu0 0.0
  %609 = vmatprep.subr.mxu0 0.0
  %610 = vmatpush2.msra.mxu0 0.0
  %611 = vmatprep.subr.mxu0 0.0
  %612 = vmatpush2.msra.mxu0 0.0
  %613 = vmatprep.subr.mxu0 0.0
  %614 = vmatpush2.msra.mxu0 0.0
  %615 = vmatprep.subr.mxu0 0.0
  %616 = vmatpush2.msra.mxu0 0.0
  %617 = vmatprep.mubr.f32.mxu0 0.0
  %618 = vmatmul.mubr.f32.gmra.mxu0 %v551
  %v619 = vpop.f32.mrf.mxu0
  %v620 = vadd.f32 0.0, %v619
  %v621 = vpop.f32.mrf.mxu0
  %622 = vdwg.mxu0
  %v623 = vadd.f32 %v171, %v620
  %v624 = vtanh.pop %v623
  %v626 = vsel %vm174, %v624, 0
  %628 = vmatprep.subr.mxu0 0.0
  %629 = vmatpush1.msra.mxu0 0.0
  %630 = vmatprep.subr.mxu0 0.0
  %631 = vmatpush1.msra.mxu0 0.0
  %632 = vmatprep.subr.mxu0 0.0
  %633 = vmatpush1.msra.mxu0 0.0
  %634 = vmatprep.subr.mxu0 0.0
  %635 = vmatpush1.msra.mxu0 0.0
  %636 = vmatprep.subr.mxu0 0.0
  %637 = vmatpush1.msra.mxu0 0.0
  %638 = vmatprep.subr.mxu0 0.0
  %639 = vmatpush1.msra.mxu0 0.0
  %640 = vmatprep.subr.mxu0 0.0
  %641 = vmatpush1.msra.mxu0 0.0
  %642 = vmatprep.subr.mxu0 0.0
  %643 = vmatpush1.msra.mxu0 0.0
  %644 = vmatprep.subr.mxu0 0.0
  %645 = vmatpush1.msra.mxu0 %v30
  %646 = vmatprep.subr.mxu0 0.0
  %647 = vmatpush1.msra.mxu0 %v29
  %648 = vmatprep.subr.mxu0 0.0
  %649 = vmatpush1.msra.mxu0 %v28
  %650 = vmatprep.subr.mxu0 0.0
  %651 = vmatpush1.msra.mxu0 %v27
  %652 = vmatprep.subr.mxu0 0.0
  %653 = vmatpush1.msra.mxu0 %v26
  %654 = vmatprep.subr.mxu0 0.0
  %655 = vmatpush1.msra.mxu0 %v25
  %656 = vmatprep.subr.mxu0 0.0
  %657 = vmatpush1.msra.mxu0 %v24
  %658 = vmatprep.subr.mxu0 0.0
  %659 = vmatpush1.msra.mxu0 %v23
  %660 = vmatprep.subr.mxu0 0.0
  %661 = vmatpush2.msra.mxu0 0.0
  %662 = vmatprep.subr.mxu0 0.0
  %663 = vmatpush2.msra.mxu0 0.0
  %664 = vmatprep.subr.mxu0 0.0
  %665 = vmatpush2.msra.mxu0 0.0
  %666 = vmatprep.subr.mxu0 0.0
  %667 = vmatpush2.msra.mxu0 0.0
  %668 = vmatprep.subr.mxu0 0.0
  %669 = vmatpush2.msra.mxu0 0.0
  %670 = vmatprep.subr.mxu0 0.0
  %671 = vmatpush2.msra.mxu0 0.0
  %672 = vmatprep.subr.mxu0 0.0
  %673 = vmatpush2.msra.mxu0 0.0
  %674 = vmatprep.subr.mxu0 0.0
  %675 = vmatpush2.msra.mxu0 0.0
  %676 = vmatprep.subr.mxu0 0.0
  %677 = vmatpush2.msra.mxu0 0.0
  %678 = vmatprep.subr.mxu0 0.0
  %679 = vmatpush2.msra.mxu0 0.0
  %680 = vmatprep.subr.mxu0 0.0
  %681 = vmatpush2.msra.mxu0 0.0
  %682 = vmatprep.subr.mxu0 0.0
  %683 = vmatpush2.msra.mxu0 0.0
  %684 = vmatprep.subr.mxu0 0.0
  %685 = vmatpush2.msra.mxu0 0.0
  %686 = vmatprep.subr.mxu0 0.0
  %687 = vmatpush2.msra.mxu0 0.0
  %688 = vmatprep.subr.mxu0 0.0
  %689 = vmatpush2.msra.mxu0 0.0
  %690 = vmatprep.subr.mxu0 0.0
  %691 = vmatpush2.msra.mxu0 0.0
  %692 = vmatprep.mubr.f32.mxu0 0.0
  %693 = vmatmul.mubr.f32.gmra.mxu0 %v626
  %v694 = vpop.f32.mrf.mxu0
  %v695 = vadd.f32 0.0, %v694
  %v696 = vpop.f32.mrf.mxu0
  %697 = vdwg.mxu0
  %v698 = vadd.f32 %v172, %v695
  %v699 = vtanh.pop %v698
  %v701 = vsel %vm174, %v699, 0
  %703 = vmatprep.subr.mxu0 0.0
  %704 = vmatpush1.msra.mxu0 0.0
  %705 = vmatprep.subr.mxu0 0.0
  %706 = vmatpush1.msra.mxu0 0.0
  %707 = vmatprep.subr.mxu0 0.0
  %708 = vmatpush1.msra.mxu0 0.0
  %709 = vmatprep.subr.mxu0 0.0
  %710 = vmatpush1.msra.mxu0 0.0
  %711 = vmatprep.subr.mxu0 0.0
  %712 = vmatpush1.msra.mxu0 0.0
  %713 = vmatprep.subr.mxu0 0.0
  %714 = vmatpush1.msra.mxu0 0.0
  %715 = vmatprep.subr.mxu0 0.0
  %716 = vmatpush1.msra.mxu0 0.0
  %717 = vmatprep.subr.mxu0 0.0
  %718 = vmatpush1.msra.mxu0 0.0
  %719 = vmatprep.subr.mxu0 0.0
  %720 = vmatpush1.msra.mxu0 %v30
  %721 = vmatprep.subr.mxu0 0.0
  %722 = vmatpush1.msra.mxu0 %v29
  %723 = vmatprep.subr.mxu0 0.0
  %724 = vmatpush1.msra.mxu0 %v28
  %725 = vmatprep.subr.mxu0 0.0
  %726 = vmatpush1.msra.mxu0 %v27
  %727 = vmatprep.subr.mxu0 0.0
  %728 = vmatpush1.msra.mxu0 %v26
  %729 = vmatprep.subr.mxu0 0.0
  %730 = vmatpush1.msra.mxu0 %v25
  %731 = vmatprep.subr.mxu0 0.0
  %732 = vmatpush1.msra.mxu0 %v24
  %733 = vmatprep.subr.mxu0 0.0
  %734 = vmatpush1.msra.mxu0 %v23
  %735 = vmatprep.subr.mxu0 0.0
  %736 = vmatpush2.msra.mxu0 0.0
  %737 = vmatprep.subr.mxu0 0.0
  %738 = vmatpush2.msra.mxu0 0.0
  %739 = vmatprep.subr.mxu0 0.0
  %740 = vmatpush2.msra.mxu0 0.0
  %741 = vmatprep.subr.mxu0 0.0
  %742 = vmatpush2.msra.mxu0 0.0
  %743 = vmatprep.subr.mxu0 0.0
  %744 = vmatpush2.msra.mxu0 0.0
  %745 = vmatprep.subr.mxu0 0.0
  %746 = vmatpush2.msra.mxu0 0.0
  %747 = vmatprep.subr.mxu0 0.0
  %748 = vmatpush2.msra.mxu0 0.0
  %749 = vmatprep.subr.mxu0 0.0
  %750 = vmatpush2.msra.mxu0 0.0
  %751 = vmatprep.subr.mxu0 0.0
  %752 = vmatpush2.msra.mxu0 0.0
  %753 = vmatprep.subr.mxu0 0.0
  %754 = vmatpush2.msra.mxu0 0.0
  %755 = vmatprep.subr.mxu0 0.0
  %756 = vmatpush2.msra.mxu0 0.0
  %757 = vmatprep.subr.mxu0 0.0
  %758 = vmatpush2.msra.mxu0 0.0
  %759 = vmatprep.subr.mxu0 0.0
  %760 = vmatpush2.msra.mxu0 0.0
  %761 = vmatprep.subr.mxu0 0.0
  %762 = vmatpush2.msra.mxu0 0.0
  %763 = vmatprep.subr.mxu0 0.0
  %764 = vmatpush2.msra.mxu0 0.0
  %765 = vmatprep.subr.mxu0 0.0
  %766 = vmatpush2.msra.mxu0 0.0
  %767 = vmatprep.mubr.f32.mxu0 0.0
  %768 = vmatmul.mubr.f32.gmra.mxu0 %v701
  %v769 = vpop.f32.mrf.mxu0
  %v770 = vadd.f32 0.0, %v769
  %v771 = vpop.f32.mrf.mxu0
  %772 = vdwg.mxu0
  %v773 = vadd.f32 %v173, %v770
  %v774 = vtanh.pop %v773
  %v775 = vsel %vm36, %v249, %v774
  %v776 = vsel %vm36, %v324, %v699
  %v777 = vsel %vm36, %v399, %v624
  %v778 = vsel %vm36, %v474, %v549
  %v779 = vsel %vm36, %v549, %v474
  %v780 = vsel %vm36, %v624, %v399
  %v781 = vsel %vm36, %v699, %v324
  %v782 = vsel %vm36, %v774, %v249
  %v783 = vld [vmem:[%s1 + $0x68] sm:$0xff]
  %v784 = vld [vmem:[%s1 + $0x70] sm:$0xff]
  %v785 = vld [vmem:[%s1 + $0x78] sm:$0xff]
  %v786 = vld [vmem:[%s1 + $0x80] sm:$0xff]
  %v787 = vld [vmem:[%s1 + $0x88] sm:$0xff]
  %v788 = vld [vmem:[%s1 + $0x90] sm:$0xff]
  %v789 = vld [vmem:[%s1 + $0x98] sm:$0xff]
  %v790 = vld [vmem:[%s1 + $0xa0] sm:$0xff]
  %v791 = vld [vmem:[%s1 + $0xa8] sm:$0xff]
  %v792 = vld [vmem:[%s1 + $0xb0] sm:$0xff]
  %v793 = vld [vmem:[%s1 + $0xb8] sm:$0xff]
  %v794 = vld [vmem:[%s1 + $0xc0] sm:$0xff]
  %v795 = vld [vmem:[%s1 + $0xc8] sm:$0xff]
  %v796 = vld [vmem:[%s1 + $0xd0] sm:$0xff]
  %v797 = vld [vmem:[%s1 + $0xd8] sm:$0xff]
  %v798 = vld [vmem:[%s1 + $0xe0] sm:$0xff]
  %v799 = vld [vmem:[%s1 + $0xe8] sm:$0x1]
  %v800 = vlaneseq
  %v801 = vshrl.u32 %v800, 7
  %v802 = vsub.s32 0, %v801
  %v803 = vrot.slane %v799, %v802
  %v805 = vsel %vm174, %v775, 0
  %v808 = vsel %vm174, %v776, 0
  %v811 = vsel %vm174, %v777, 0
  %v814 = vsel %vm174, %v778, 0
  %v817 = vsel %vm174, %v779, 0
  %v820 = vsel %vm174, %v780, 0
  %v823 = vsel %vm174, %v781, 0
  %v826 = vsel %vm174, %v782, 0
  %828 = vmatprep.subr.mxu0 0.0
  %829 = vmatpush1.msra.mxu0 0.0
  %830 = vmatprep.subr.mxu0 0.0
  %831 = vmatpush1.msra.mxu0 0.0
  %832 = vmatprep.subr.mxu0 0.0
  %833 = vmatpush1.msra.mxu0 0.0
  %834 = vmatprep.subr.mxu0 0.0
  %835 = vmatpush1.msra.mxu0 0.0
  %836 = vmatprep.subr.mxu0 0.0
  %837 = vmatpush1.msra.mxu0 0.0
  %838 = vmatprep.subr.mxu0 0.0
  %839 = vmatpush1.msra.mxu0 0.0
  %840 = vmatprep.subr.mxu0 0.0
  %841 = vmatpush1.msra.mxu0 0.0
  %842 = vmatprep.subr.mxu0 0.0
  %843 = vmatpush1.msra.mxu0 0.0
  %844 = vmatprep.subr.mxu0 0.0
  %845 = vmatpush1.msra.mxu0 %v790
  %846 = vmatprep.subr.mxu0 0.0
  %847 = vmatpush1.msra.mxu0 %v789
  %848 = vmatprep.subr.mxu0 0.0
  %849 = vmatpush1.msra.mxu0 %v788
  %850 = vmatprep.subr.mxu0 0.0
  %851 = vmatpush1.msra.mxu0 %v787
  %852 = vmatprep.subr.mxu0 0.0
  %853 = vmatpush1.msra.mxu0 %v786
  %854 = vmatprep.subr.mxu0 0.0
  %855 = vmatpush1.msra.mxu0 %v785
  %856 = vmatprep.subr.mxu0 0.0
  %857 = vmatpush1.msra.mxu0 %v784
  %858 = vmatprep.subr.mxu0 0.0
  %859 = vmatpush1.msra.mxu0 %v783
  %860 = vmatprep.subr.mxu0 0.0
  %861 = vmatpush2.msra.mxu0 0.0
  %862 = vmatprep.subr.mxu0 0.0
  %863 = vmatpush2.msra.mxu0 0.0
  %864 = vmatprep.subr.mxu0 0.0
  %865 = vmatpush2.msra.mxu0 0.0
  %866 = vmatprep.subr.mxu0 0.0
  %867 = vmatpush2.msra.mxu0 0.0
  %868 = vmatprep.subr.mxu0 0.0
  %869 = vmatpush2.msra.mxu0 0.0
  %870 = vmatprep.subr.mxu0 0.0
  %871 = vmatpush2.msra.mxu0 0.0
  %872 = vmatprep.subr.mxu0 0.0
  %873 = vmatpush2.msra.mxu0 0.0
  %874 = vmatprep.subr.mxu0 0.0
  %875 = vmatpush2.msra.mxu0 0.0
  %876 = vmatprep.subr.mxu0 0.0
  %877 = vmatpush2.msra.mxu0 0.0
  %878 = vmatprep.subr.mxu0 0.0
  %879 = vmatpush2.msra.mxu0 0.0
  %880 = vmatprep.subr.mxu0 0.0
  %881 = vmatpush2.msra.mxu0 0.0
  %882 = vmatprep.subr.mxu0 0.0
  %883 = vmatpush2.msra.mxu0 0.0
  %884 = vmatprep.subr.mxu0 0.0
  %885 = vmatpush2.msra.mxu0 0.0
  %886 = vmatprep.subr.mxu0 0.0
  %887 = vmatpush2.msra.mxu0 0.0
  %888 = vmatprep.subr.mxu0 0.0
  %889 = vmatpush2.msra.mxu0 0.0
  %890 = vmatprep.subr.mxu0 0.0
  %891 = vmatpush2.msra.mxu0 0.0
  %892 = vmatprep.mubr.f32.mxu0 0.0
  %893 = vmatmul.mubr.f32.gmra.mxu0 %v805
  %v894 = vpop.f32.mrf.mxu0
  %v895 = vadd.f32 %v803, %v894
  %v896 = vpop.f32.mrf.mxu0
  %897 = vmatprep.mubr.f32.mxu0 0.0
  %898 = vmatmul.mubr.f32.gmra.mxu0 %v808
  %v899 = vpop.f32.mrf.mxu0
  %v900 = vadd.f32 %v803, %v899
  %v901 = vpop.f32.mrf.mxu0
  %902 = vmatprep.mubr.f32.mxu0 0.0
  %903 = vmatmul.mubr.f32.gmra.mxu0 %v811
  %v904 = vpop.f32.mrf.mxu0
  %v905 = vadd.f32 %v803, %v904
  %v906 = vpop.f32.mrf.mxu0
  %907 = vmatprep.mubr.f32.mxu0 0.0
  %908 = vmatmul.mubr.f32.gmra.mxu0 %v814
  %v909 = vpop.f32.mrf.mxu0
  %v910 = vadd.f32 %v803, %v909
  %v911 = vpop.f32.mrf.mxu0
  %912 = vmatprep.mubr.f32.mxu0 0.0
  %913 = vmatmul.mubr.f32.gmra.mxu0 %v817
  %v914 = vpop.f32.mrf.mxu0
  %v915 = vadd.f32 %v803, %v914
  %v916 = vpop.f32.mrf.mxu0
  %917 = vmatprep.mubr.f32.mxu0 0.0
  %918 = vmatmul.mubr.f32.gmra.mxu0 %v820
  %v919 = vpop.f32.mrf.mxu0
  %v920 = vadd.f32 %v803, %v919
  %v921 = vpop.f32.mrf.mxu0
  %922 = vmatprep.mubr.f32.mxu0 0.0
  %923 = vmatmul.mubr.f32.gmra.mxu0 %v823
  %v924 = vpop.f32.mrf.mxu0
  %v925 = vadd.f32 %v803, %v924
  %v926 = vpop.f32.mrf.mxu0
  %927 = vmatprep.mubr.f32.mxu0 0.0
  %928 = vmatmul.mubr.f32.gmra.mxu0 %v826
  %v929 = vpop.f32.mrf.mxu0
  %v930 = vadd.f32 %v803, %v929
  %v931 = vpop.f32.mrf.mxu0
  %932 = vdwg.mxu0
  %v933 = vsel %vm36, %v895, %v930
  %v934 = vsel %vm36, %v900, %v925
  %v935 = vsel %vm36, %v905, %v920
  %v936 = vsel %vm36, %v910, %v915
  %v937 = vsel %vm36, %v915, %v910
  %v938 = vsel %vm36, %v920, %v905
  %v939 = vsel %vm36, %v925, %v900
  %v940 = vsel %vm36, %v930, %v895
  %941 = vmatprep.subr.mxu0 0.0
  %942 = vmatpush1.msra.mxu0 0.0
  %943 = vmatprep.subr.mxu0 0.0
  %944 = vmatpush1.msra.mxu0 0.0
  %945 = vmatprep.subr.mxu0 0.0
  %946 = vmatpush1.msra.mxu0 0.0
  %947 = vmatprep.subr.mxu0 0.0
  %948 = vmatpush1.msra.mxu0 0.0
  %949 = vmatprep.subr.mxu0 0.0
  %950 = vmatpush1.msra.mxu0 0.0
  %951 = vmatprep.subr.mxu0 0.0
  %952 = vmatpush1.msra.mxu0 0.0
  %953 = vmatprep.subr.mxu0 0.0
  %954 = vmatpush1.msra.mxu0 0.0
  %955 = vmatprep.subr.mxu0 0.0
  %956 = vmatpush1.msra.mxu0 0.0
  %957 = vmatprep.subr.mxu0 0.0
  %958 = vmatpush1.msra.mxu0 %v798
  %959 = vmatprep.subr.mxu0 0.0
  %960 = vmatpush1.msra.mxu0 %v797
  %961 = vmatprep.subr.mxu0 0.0
  %962 = vmatpush1.msra.mxu0 %v796
  %963 = vmatprep.subr.mxu0 0.0
  %964 = vmatpush1.msra.mxu0 %v795
  %965 = vmatprep.subr.mxu0 0.0
  %966 = vmatpush1.msra.mxu0 %v794
  %967 = vmatprep.subr.mxu0 0.0
  %968 = vmatpush1.msra.mxu0 %v793
  %969 = vmatprep.subr.mxu0 0.0
  %970 = vmatpush1.msra.mxu0 %v792
  %971 = vmatprep.subr.mxu0 0.0
  %972 = vmatpush1.msra.mxu0 %v791
  %973 = vmatprep.subr.mxu0 0.0
  %974 = vmatpush2.msra.mxu0 0.0
  %975 = vmatprep.subr.mxu0 0.0
  %976 = vmatpush2.msra.mxu0 0.0
  %977 = vmatprep.subr.mxu0 0.0
  %978 = vmatpush2.msra.mxu0 0.0
  %979 = vmatprep.subr.mxu0 0.0
  %980 = vmatpush2.msra.mxu0 0.0
  %981 = vmatprep.subr.mxu0 0.0
  %982 = vmatpush2.msra.mxu0 0.0
  %983 = vmatprep.subr.mxu0 0.0
  %984 = vmatpush2.msra.mxu0 0.0
  %985 = vmatprep.subr.mxu0 0.0
  %986 = vmatpush2.msra.mxu0 0.0
  %987 = vmatprep.subr.mxu0 0.0
  %988 = vmatpush2.msra.mxu0 0.0
  %989 = vmatprep.subr.mxu0 0.0
  %990 = vmatpush2.msra.mxu0 0.0
  %991 = vmatprep.subr.mxu0 0.0
  %992 = vmatpush2.msra.mxu0 0.0
  %993 = vmatprep.subr.mxu0 0.0
  %994 = vmatpush2.msra.mxu0 0.0
  %995 = vmatprep.subr.mxu0 0.0
  %996 = vmatpush2.msra.mxu0 0.0
  %997 = vmatprep.subr.mxu0 0.0
  %998 = vmatpush2.msra.mxu0 0.0
  %999 = vmatprep.subr.mxu0 0.0
  %1000 = vmatpush2.msra.mxu0 0.0
  %1001 = vmatprep.subr.mxu0 0.0
  %1002 = vmatpush2.msra.mxu0 0.0
  %1003 = vmatprep.subr.mxu0 0.0
  %1004 = vmatpush2.msra.mxu0 0.0
  %1005 = vmatprep.mubr.f32.mxu0 0.0
  %1006 = vmatmul.mubr.f32.gmra.mxu0 %v176
  %v1007 = vpop.f32.mrf.mxu0
  %v1008 = vadd.f32 0.0, %v1007
  %v1009 = vpop.f32.mrf.mxu0
  %1010 = vdwg.mxu0
  %v1011 = vadd.f32 %v933, %v1008
  %v1012 = vtanh.pop %v1011
  %v1014 = vsel %vm174, %v1012, 0
  %1016 = vmatprep.subr.mxu0 0.0
  %1017 = vmatpush1.msra.mxu0 0.0
  %1018 = vmatprep.subr.mxu0 0.0
  %1019 = vmatpush1.msra.mxu0 0.0
  %1020 = vmatprep.subr.mxu0 0.0
  %1021 = vmatpush1.msra.mxu0 0.0
  %1022 = vmatprep.subr.mxu0 0.0
  %1023 = vmatpush1.msra.mxu0 0.0
  %1024 = vmatprep.subr.mxu0 0.0
  %1025 = vmatpush1.msra.mxu0 0.0
  %1026 = vmatprep.subr.mxu0 0.0
  %1027 = vmatpush1.msra.mxu0 0.0
  %1028 = vmatprep.subr.mxu0 0.0
  %1029 = vmatpush1.msra.mxu0 0.0
  %1030 = vmatprep.subr.mxu0 0.0
  %1031 = vmatpush1.msra.mxu0 0.0
  %1032 = vmatprep.subr.mxu0 0.0
  %1033 = vmatpush1.msra.mxu0 %v798
  %1034 = vmatprep.subr.mxu0 0.0
  %1035 = vmatpush1.msra.mxu0 %v797
  %1036 = vmatprep.subr.mxu0 0.0
  %1037 = vmatpush1.msra.mxu0 %v796
  %1038 = vmatprep.subr.mxu0 0.0
  %1039 = vmatpush1.msra.mxu0 %v795
  %1040 = vmatprep.subr.mxu0 0.0
  %1041 = vmatpush1.msra.mxu0 %v794
  %1042 = vmatprep.subr.mxu0 0.0
  %1043 = vmatpush1.msra.mxu0 %v793
  %1044 = vmatprep.subr.mxu0 0.0
  %1045 = vmatpush1.msra.mxu0 %v792
  %1046 = vmatprep.subr.mxu0 0.0
  %1047 = vmatpush1.msra.mxu0 %v791
  %1048 = vmatprep.subr.mxu0 0.0
  %1049 = vmatpush2.msra.mxu0 0.0
  %1050 = vmatprep.subr.mxu0 0.0
  %1051 = vmatpush2.msra.mxu0 0.0
  %1052 = vmatprep.subr.mxu0 0.0
  %1053 = vmatpush2.msra.mxu0 0.0
  %1054 = vmatprep.subr.mxu0 0.0
  %1055 = vmatpush2.msra.mxu0 0.0
  %1056 = vmatprep.subr.mxu0 0.0
  %1057 = vmatpush2.msra.mxu0 0.0
  %1058 = vmatprep.subr.mxu0 0.0
  %1059 = vmatpush2.msra.mxu0 0.0
  %1060 = vmatprep.subr.mxu0 0.0
  %1061 = vmatpush2.msra.mxu0 0.0
  %1062 = vmatprep.subr.mxu0 0.0
  %1063 = vmatpush2.msra.mxu0 0.0
  %1064 = vmatprep.subr.mxu0 0.0
  %1065 = vmatpush2.msra.mxu0 0.0
  %1066 = vmatprep.subr.mxu0 0.0
  %1067 = vmatpush2.msra.mxu0 0.0
  %1068 = vmatprep.subr.mxu0 0.0
  %1069 = vmatpush2.msra.mxu0 0.0
  %1070 = vmatprep.subr.mxu0 0.0
  %1071 = vmatpush2.msra.mxu0 0.0
  %1072 = vmatprep.subr.mxu0 0.0
  %1073 = vmatpush2.msra.mxu0 0.0
  %1074 = vmatprep.subr.mxu0 0.0
  %1075 = vmatpush2.msra.mxu0 0.0
  %1076 = vmatprep.subr.mxu0 0.0
  %1077 = vmatpush2.msra.mxu0 0.0
  %1078 = vmatprep.subr.mxu0 0.0
  %1079 = vmatpush2.msra.mxu0 0.0
  %1080 = vmatprep.mubr.f32.mxu0 0.0
  %1081 = vmatmul.mubr.f32.gmra.mxu0 %v1014
  %v1082 = vpop.f32.mrf.mxu0
  %v1083 = vadd.f32 0.0, %v1082
  %v1084 = vpop.f32.mrf.mxu0
  %1085 = vdwg.mxu0
  %v1086 = vadd.f32 %v934, %v1083
  %v1087 = vtanh.pop %v1086
  %v1089 = vsel %vm174, %v1087, 0
  %1091 = vmatprep.subr.mxu0 0.0
  %1092 = vmatpush1.msra.mxu0 0.0
  %1093 = vmatprep.subr.mxu0 0.0
  %1094 = vmatpush1.msra.mxu0 0.0
  %1095 = vmatprep.subr.mxu0 0.0
  %1096 = vmatpush1.msra.mxu0 0.0
  %1097 = vmatprep.subr.mxu0 0.0
  %1098 = vmatpush1.msra.mxu0 0.0
  %1099 = vmatprep.subr.mxu0 0.0
  %1100 = vmatpush1.msra.mxu0 0.0
  %1101 = vmatprep.subr.mxu0 0.0
  %1102 = vmatpush1.msra.mxu0 0.0
  %1103 = vmatprep.subr.mxu0 0.0
  %1104 = vmatpush1.msra.mxu0 0.0
  %1105 = vmatprep.subr.mxu0 0.0
  %1106 = vmatpush1.msra.mxu0 0.0
  %1107 = vmatprep.subr.mxu0 0.0
  %1108 = vmatpush1.msra.mxu0 %v798
  %1109 = vmatprep.subr.mxu0 0.0
  %1110 = vmatpush1.msra.mxu0 %v797
  %1111 = vmatprep.subr.mxu0 0.0
  %1112 = vmatpush1.msra.mxu0 %v796
  %1113 = vmatprep.subr.mxu0 0.0
  %1114 = vmatpush1.msra.mxu0 %v795
  %1115 = vmatprep.subr.mxu0 0.0
  %1116 = vmatpush1.msra.mxu0 %v794
  %1117 = vmatprep.subr.mxu0 0.0
  %1118 = vmatpush1.msra.mxu0 %v793
  %1119 = vmatprep.subr.mxu0 0.0
  %1120 = vmatpush1.msra.mxu0 %v792
  %1121 = vmatprep.subr.mxu0 0.0
  %1122 = vmatpush1.msra.mxu0 %v791
  %1123 = vmatprep.subr.mxu0 0.0
  %1124 = vmatpush2.msra.mxu0 0.0
  %1125 = vmatprep.subr.mxu0 0.0
  %1126 = vmatpush2.msra.mxu0 0.0
  %1127 = vmatprep.subr.mxu0 0.0
  %1128 = vmatpush2.msra.mxu0 0.0
  %1129 = vmatprep.subr.mxu0 0.0
  %1130 = vmatpush2.msra.mxu0 0.0
  %1131 = vmatprep.subr.mxu0 0.0
  %1132 = vmatpush2.msra.mxu0 0.0
  %1133 = vmatprep.subr.mxu0 0.0
  %1134 = vmatpush2.msra.mxu0 0.0
  %1135 = vmatprep.subr.mxu0 0.0
  %1136 = vmatpush2.msra.mxu0 0.0
  %1137 = vmatprep.subr.mxu0 0.0
  %1138 = vmatpush2.msra.mxu0 0.0
  %1139 = vmatprep.subr.mxu0 0.0
  %1140 = vmatpush2.msra.mxu0 0.0
  %1141 = vmatprep.subr.mxu0 0.0
  %1142 = vmatpush2.msra.mxu0 0.0
  %1143 = vmatprep.subr.mxu0 0.0
  %1144 = vmatpush2.msra.mxu0 0.0
  %1145 = vmatprep.subr.mxu0 0.0
  %1146 = vmatpush2.msra.mxu0 0.0
  %1147 = vmatprep.subr.mxu0 0.0
  %1148 = vmatpush2.msra.mxu0 0.0
  %1149 = vmatprep.subr.mxu0 0.0
  %1150 = vmatpush2.msra.mxu0 0.0
  %1151 = vmatprep.subr.mxu0 0.0
  %1152 = vmatpush2.msra.mxu0 0.0
  %1153 = vmatprep.subr.mxu0 0.0
  %1154 = vmatpush2.msra.mxu0 0.0
  %1155 = vmatprep.mubr.f32.mxu0 0.0
  %1156 = vmatmul.mubr.f32.gmra.mxu0 %v1089
  %v1157 = vpop.f32.mrf.mxu0
  %v1158 = vadd.f32 0.0, %v1157
  %v1159 = vpop.f32.mrf.mxu0
  %1160 = vdwg.mxu0
  %v1161 = vadd.f32 %v935, %v1158
  %v1162 = vtanh.pop %v1161
  %v1164 = vsel %vm174, %v1162, 0
  %1166 = vmatprep.subr.mxu0 0.0
  %1167 = vmatpush1.msra.mxu0 0.0
  %1168 = vmatprep.subr.mxu0 0.0
  %1169 = vmatpush1.msra.mxu0 0.0
  %1170 = vmatprep.subr.mxu0 0.0
  %1171 = vmatpush1.msra.mxu0 0.0
  %1172 = vmatprep.subr.mxu0 0.0
  %1173 = vmatpush1.msra.mxu0 0.0
  %1174 = vmatprep.subr.mxu0 0.0
  %1175 = vmatpush1.msra.mxu0 0.0
  %1176 = vmatprep.subr.mxu0 0.0
  %1177 = vmatpush1.msra.mxu0 0.0
  %1178 = vmatprep.subr.mxu0 0.0
  %1179 = vmatpush1.msra.mxu0 0.0
  %1180 = vmatprep.subr.mxu0 0.0
  %1181 = vmatpush1.msra.mxu0 0.0
  %1182 = vmatprep.subr.mxu0 0.0
  %1183 = vmatpush1.msra.mxu0 %v798
  %1184 = vmatprep.subr.mxu0 0.0
  %1185 = vmatpush1.msra.mxu0 %v797
  %1186 = vmatprep.subr.mxu0 0.0
  %1187 = vmatpush1.msra.mxu0 %v796
  %1188 = vmatprep.subr.mxu0 0.0
  %1189 = vmatpush1.msra.mxu0 %v795
  %1190 = vmatprep.subr.mxu0 0.0
  %1191 = vmatpush1.msra.mxu0 %v794
  %1192 = vmatprep.subr.mxu0 0.0
  %1193 = vmatpush1.msra.mxu0 %v793
  %1194 = vmatprep.subr.mxu0 0.0
  %1195 = vmatpush1.msra.mxu0 %v792
  %1196 = vmatprep.subr.mxu0 0.0
  %1197 = vmatpush1.msra.mxu0 %v791
  %1198 = vmatprep.subr.mxu0 0.0
  %1199 = vmatpush2.msra.mxu0 0.0
  %1200 = vmatprep.subr.mxu0 0.0
  %1201 = vmatpush2.msra.mxu0 0.0
  %1202 = vmatprep.subr.mxu0 0.0
  %1203 = vmatpush2.msra.mxu0 0.0
  %1204 = vmatprep.subr.mxu0 0.0
  %1205 = vmatpush2.msra.mxu0 0.0
  %1206 = vmatprep.subr.mxu0 0.0
  %1207 = vmatpush2.msra.mxu0 0.0
  %1208 = vmatprep.subr.mxu0 0.0
  %1209 = vmatpush2.msra.mxu0 0.0
  %1210 = vmatprep.subr.mxu0 0.0
  %1211 = vmatpush2.msra.mxu0 0.0
  %1212 = vmatprep.subr.mxu0 0.0
  %1213 = vmatpush2.msra.mxu0 0.0
  %1214 = vmatprep.subr.mxu0 0.0
  %1215 = vmatpush2.msra.mxu0 0.0
  %1216 = vmatprep.subr.mxu0 0.0
  %1217 = vmatpush2.msra.mxu0 0.0
  %1218 = vmatprep.subr.mxu0 0.0
  %1219 = vmatpush2.msra.mxu0 0.0
  %1220 = vmatprep.subr.mxu0 0.0
  %1221 = vmatpush2.msra.mxu0 0.0
  %1222 = vmatprep.subr.mxu0 0.0
  %1223 = vmatpush2.msra.mxu0 0.0
  %1224 = vmatprep.subr.mxu0 0.0
  %1225 = vmatpush2.msra.mxu0 0.0
  %1226 = vmatprep.subr.mxu0 0.0
  %1227 = vmatpush2.msra.mxu0 0.0
  %1228 = vmatprep.subr.mxu0 0.0
  %1229 = vmatpush2.msra.mxu0 0.0
  %1230 = vmatprep.mubr.f32.mxu0 0.0
  %1231 = vmatmul.mubr.f32.gmra.mxu0 %v1164
  %v1232 = vpop.f32.mrf.mxu0
  %v1233 = vadd.f32 0.0, %v1232
  %v1234 = vpop.f32.mrf.mxu0
  %1235 = vdwg.mxu0
  %v1236 = vadd.f32 %v936, %v1233
  %v1237 = vtanh.pop %v1236
  %v1239 = vsel %vm174, %v1237, 0
  %1241 = vmatprep.subr.mxu0 0.0
  %1242 = vmatpush1.msra.mxu0 0.0
  %1243 = vmatprep.subr.mxu0 0.0
  %1244 = vmatpush1.msra.mxu0 0.0
  %1245 = vmatprep.subr.mxu0 0.0
  %1246 = vmatpush1.msra.mxu0 0.0
  %1247 = vmatprep.subr.mxu0 0.0
  %1248 = vmatpush1.msra.mxu0 0.0
  %1249 = vmatprep.subr.mxu0 0.0
  %1250 = vmatpush1.msra.mxu0 0.0
  %1251 = vmatprep.subr.mxu0 0.0
  %1252 = vmatpush1.msra.mxu0 0.0
  %1253 = vmatprep.subr.mxu0 0.0
  %1254 = vmatpush1.msra.mxu0 0.0
  %1255 = vmatprep.subr.mxu0 0.0
  %1256 = vmatpush1.msra.mxu0 0.0
  %1257 = vmatprep.subr.mxu0 0.0
  %1258 = vmatpush1.msra.mxu0 %v798
  %1259 = vmatprep.subr.mxu0 0.0
  %1260 = vmatpush1.msra.mxu0 %v797
  %1261 = vmatprep.subr.mxu0 0.0
  %1262 = vmatpush1.msra.mxu0 %v796
  %1263 = vmatprep.subr.mxu0 0.0
  %1264 = vmatpush1.msra.mxu0 %v795
  %1265 = vmatprep.subr.mxu0 0.0
  %1266 = vmatpush1.msra.mxu0 %v794
  %1267 = vmatprep.subr.mxu0 0.0
  %1268 = vmatpush1.msra.mxu0 %v793
  %1269 = vmatprep.subr.mxu0 0.0
  %1270 = vmatpush1.msra.mxu0 %v792
  %1271 = vmatprep.subr.mxu0 0.0
  %1272 = vmatpush1.msra.mxu0 %v791
  %1273 = vmatprep.subr.mxu0 0.0
  %1274 = vmatpush2.msra.mxu0 0.0
  %1275 = vmatprep.subr.mxu0 0.0
  %1276 = vmatpush2.msra.mxu0 0.0
  %1277 = vmatprep.subr.mxu0 0.0
  %1278 = vmatpush2.msra.mxu0 0.0
  %1279 = vmatprep.subr.mxu0 0.0
  %1280 = vmatpush2.msra.mxu0 0.0
  %1281 = vmatprep.subr.mxu0 0.0
  %1282 = vmatpush2.msra.mxu0 0.0
  %1283 = vmatprep.subr.mxu0 0.0
  %1284 = vmatpush2.msra.mxu0 0.0
  %1285 = vmatprep.subr.mxu0 0.0
  %1286 = vmatpush2.msra.mxu0 0.0
  %1287 = vmatprep.subr.mxu0 0.0
  %1288 = vmatpush2.msra.mxu0 0.0
  %1289 = vmatprep.subr.mxu0 0.0
  %1290 = vmatpush2.msra.mxu0 0.0
  %1291 = vmatprep.subr.mxu0 0.0
  %1292 = vmatpush2.msra.mxu0 0.0
  %1293 = vmatprep.subr.mxu0 0.0
  %1294 = vmatpush2.msra.mxu0 0.0
  %1295 = vmatprep.subr.mxu0 0.0
  %1296 = vmatpush2.msra.mxu0 0.0
  %1297 = vmatprep.subr.mxu0 0.0
  %1298 = vmatpush2.msra.mxu0 0.0
  %1299 = vmatprep.subr.mxu0 0.0
  %1300 = vmatpush2.msra.mxu0 0.0
  %1301 = vmatprep.subr.mxu0 0.0
  %1302 = vmatpush2.msra.mxu0 0.0
  %1303 = vmatprep.subr.mxu0 0.0
  %1304 = vmatpush2.msra.mxu0 0.0
  %1305 = vmatprep.mubr.f32.mxu0 0.0
  %1306 = vmatmul.mubr.f32.gmra.mxu0 %v1239
  %v1307 = vpop.f32.mrf.mxu0
  %v1308 = vadd.f32 0.0, %v1307
  %v1309 = vpop.f32.mrf.mxu0
  %1310 = vdwg.mxu0
  %v1311 = vadd.f32 %v937, %v1308
  %v1312 = vtanh.pop %v1311
  %v1314 = vsel %vm174, %v1312, 0
  %1316 = vmatprep.subr.mxu0 0.0
  %1317 = vmatpush1.msra.mxu0 0.0
  %1318 = vmatprep.subr.mxu0 0.0
  %1319 = vmatpush1.msra.mxu0 0.0
  %1320 = vmatprep.subr.mxu0 0.0
  %1321 = vmatpush1.msra.mxu0 0.0
  %1322 = vmatprep.subr.mxu0 0.0
  %1323 = vmatpush1.msra.mxu0 0.0
  %1324 = vmatprep.subr.mxu0 0.0
  %1325 = vmatpush1.msra.mxu0 0.0
  %1326 = vmatprep.subr.mxu0 0.0
  %1327 = vmatpush1.msra.mxu0 0.0
  %1328 = vmatprep.subr.mxu0 0.0
  %1329 = vmatpush1.msra.mxu0 0.0
  %1330 = vmatprep.subr.mxu0 0.0
  %1331 = vmatpush1.msra.mxu0 0.0
  %1332 = vmatprep.subr.mxu0 0.0
  %1333 = vmatpush1.msra.mxu0 %v798
  %1334 = vmatprep.subr.mxu0 0.0
  %1335 = vmatpush1.msra.mxu0 %v797
  %1336 = vmatprep.subr.mxu0 0.0
  %1337 = vmatpush1.msra.mxu0 %v796
  %1338 = vmatprep.subr.mxu0 0.0
  %1339 = vmatpush1.msra.mxu0 %v795
  %1340 = vmatprep.subr.mxu0 0.0
  %1341 = vmatpush1.msra.mxu0 %v794
  %1342 = vmatprep.subr.mxu0 0.0
  %1343 = vmatpush1.msra.mxu0 %v793
  %1344 = vmatprep.subr.mxu0 0.0
  %1345 = vmatpush1.msra.mxu0 %v792
  %1346 = vmatprep.subr.mxu0 0.0
  %1347 = vmatpush1.msra.mxu0 %v791
  %1348 = vmatprep.subr.mxu0 0.0
  %1349 = vmatpush2.msra.mxu0 0.0
  %1350 = vmatprep.subr.mxu0 0.0
  %1351 = vmatpush2.msra.mxu0 0.0
  %1352 = vmatprep.subr.mxu0 0.0
  %1353 = vmatpush2.msra.mxu0 0.0
  %1354 = vmatprep.subr.mxu0 0.0
  %1355 = vmatpush2.msra.mxu0 0.0
  %1356 = vmatprep.subr.mxu0 0.0
  %1357 = vmatpush2.msra.mxu0 0.0
  %1358 = vmatprep.subr.mxu0 0.0
  %1359 = vmatpush2.msra.mxu0 0.0
  %1360 = vmatprep.subr.mxu0 0.0
  %1361 = vmatpush2.msra.mxu0 0.0
  %1362 = vmatprep.subr.mxu0 0.0
  %1363 = vmatpush2.msra.mxu0 0.0
  %1364 = vmatprep.subr.mxu0 0.0
  %1365 = vmatpush2.msra.mxu0 0.0
  %1366 = vmatprep.subr.mxu0 0.0
  %1367 = vmatpush2.msra.mxu0 0.0
  %1368 = vmatprep.subr.mxu0 0.0
  %1369 = vmatpush2.msra.mxu0 0.0
  %1370 = vmatprep.subr.mxu0 0.0
  %1371 = vmatpush2.msra.mxu0 0.0
  %1372 = vmatprep.subr.mxu0 0.0
  %1373 = vmatpush2.msra.mxu0 0.0
  %1374 = vmatprep.subr.mxu0 0.0
  %1375 = vmatpush2.msra.mxu0 0.0
  %1376 = vmatprep.subr.mxu0 0.0
  %1377 = vmatpush2.msra.mxu0 0.0
  %1378 = vmatprep.subr.mxu0 0.0
  %1379 = vmatpush2.msra.mxu0 0.0
  %1380 = vmatprep.mubr.f32.mxu0 0.0
  %1381 = vmatmul.mubr.f32.gmra.mxu0 %v1314
  %v1382 = vpop.f32.mrf.mxu0
  %v1383 = vadd.f32 0.0, %v1382
  %v1384 = vpop.f32.mrf.mxu0
  %1385 = vdwg.mxu0
  %v1386 = vadd.f32 %v938, %v1383
  %v1387 = vtanh.pop %v1386
  %v1389 = vsel %vm174, %v1387, 0
  %1391 = vmatprep.subr.mxu0 0.0
  %1392 = vmatpush1.msra.mxu0 0.0
  %1393 = vmatprep.subr.mxu0 0.0
  %1394 = vmatpush1.msra.mxu0 0.0
  %1395 = vmatprep.subr.mxu0 0.0
  %1396 = vmatpush1.msra.mxu0 0.0
  %1397 = vmatprep.subr.mxu0 0.0
  %1398 = vmatpush1.msra.mxu0 0.0
  %1399 = vmatprep.subr.mxu0 0.0
  %1400 = vmatpush1.msra.mxu0 0.0
  %1401 = vmatprep.subr.mxu0 0.0
  %1402 = vmatpush1.msra.mxu0 0.0
  %1403 = vmatprep.subr.mxu0 0.0
  %1404 = vmatpush1.msra.mxu0 0.0
  %1405 = vmatprep.subr.mxu0 0.0
  %1406 = vmatpush1.msra.mxu0 0.0
  %1407 = vmatprep.subr.mxu0 0.0
  %1408 = vmatpush1.msra.mxu0 %v798
  %1409 = vmatprep.subr.mxu0 0.0
  %1410 = vmatpush1.msra.mxu0 %v797
  %1411 = vmatprep.subr.mxu0 0.0
  %1412 = vmatpush1.msra.mxu0 %v796
  %1413 = vmatprep.subr.mxu0 0.0
  %1414 = vmatpush1.msra.mxu0 %v795
  %1415 = vmatprep.subr.mxu0 0.0
  %1416 = vmatpush1.msra.mxu0 %v794
  %1417 = vmatprep.subr.mxu0 0.0
  %1418 = vmatpush1.msra.mxu0 %v793
  %1419 = vmatprep.subr.mxu0 0.0
  %1420 = vmatpush1.msra.mxu0 %v792
  %1421 = vmatprep.subr.mxu0 0.0
  %1422 = vmatpush1.msra.mxu0 %v791
  %1423 = vmatprep.subr.mxu0 0.0
  %1424 = vmatpush2.msra.mxu0 0.0
  %1425 = vmatprep.subr.mxu0 0.0
  %1426 = vmatpush2.msra.mxu0 0.0
  %1427 = vmatprep.subr.mxu0 0.0
  %1428 = vmatpush2.msra.mxu0 0.0
  %1429 = vmatprep.subr.mxu0 0.0
  %1430 = vmatpush2.msra.mxu0 0.0
  %1431 = vmatprep.subr.mxu0 0.0
  %1432 = vmatpush2.msra.mxu0 0.0
  %1433 = vmatprep.subr.mxu0 0.0
  %1434 = vmatpush2.msra.mxu0 0.0
  %1435 = vmatprep.subr.mxu0 0.0
  %1436 = vmatpush2.msra.mxu0 0.0
  %1437 = vmatprep.subr.mxu0 0.0
  %1438 = vmatpush2.msra.mxu0 0.0
  %1439 = vmatprep.subr.mxu0 0.0
  %1440 = vmatpush2.msra.mxu0 0.0
  %1441 = vmatprep.subr.mxu0 0.0
  %1442 = vmatpush2.msra.mxu0 0.0
  %1443 = vmatprep.subr.mxu0 0.0
  %1444 = vmatpush2.msra.mxu0 0.0
  %1445 = vmatprep.subr.mxu0 0.0
  %1446 = vmatpush2.msra.mxu0 0.0
  %1447 = vmatprep.subr.mxu0 0.0
  %1448 = vmatpush2.msra.mxu0 0.0
  %1449 = vmatprep.subr.mxu0 0.0
  %1450 = vmatpush2.msra.mxu0 0.0
  %1451 = vmatprep.subr.mxu0 0.0
  %1452 = vmatpush2.msra.mxu0 0.0
  %1453 = vmatprep.subr.mxu0 0.0
  %1454 = vmatpush2.msra.mxu0 0.0
  %1455 = vmatprep.mubr.f32.mxu0 0.0
  %1456 = vmatmul.mubr.f32.gmra.mxu0 %v1389
  %v1457 = vpop.f32.mrf.mxu0
  %v1458 = vadd.f32 0.0, %v1457
  %v1459 = vpop.f32.mrf.mxu0
  %1460 = vdwg.mxu0
  %v1461 = vadd.f32 %v939, %v1458
  %v1462 = vtanh.pop %v1461
  %v1464 = vsel %vm174, %v1462, 0
  %1466 = vmatprep.subr.mxu0 0.0
  %1467 = vmatpush1.msra.mxu0 0.0
  %1468 = vmatprep.subr.mxu0 0.0
  %1469 = vmatpush1.msra.mxu0 0.0
  %1470 = vmatprep.subr.mxu0 0.0
  %1471 = vmatpush1.msra.mxu0 0.0
  %1472 = vmatprep.subr.mxu0 0.0
  %1473 = vmatpush1.msra.mxu0 0.0
  %1474 = vmatprep.subr.mxu0 0.0
  %1475 = vmatpush1.msra.mxu0 0.0
  %1476 = vmatprep.subr.mxu0 0.0
  %1477 = vmatpush1.msra.mxu0 0.0
  %1478 = vmatprep.subr.mxu0 0.0
  %1479 = vmatpush1.msra.mxu0 0.0
  %1480 = vmatprep.subr.mxu0 0.0
  %1481 = vmatpush1.msra.mxu0 0.0
  %1482 = vmatprep.subr.mxu0 0.0
  %1483 = vmatpush1.msra.mxu0 %v798
  %1484 = vmatprep.subr.mxu0 0.0
  %1485 = vmatpush1.msra.mxu0 %v797
  %1486 = vmatprep.subr.mxu0 0.0
  %1487 = vmatpush1.msra.mxu0 %v796
  %1488 = vmatprep.subr.mxu0 0.0
  %1489 = vmatpush1.msra.mxu0 %v795
  %1490 = vmatprep.subr.mxu0 0.0
  %1491 = vmatpush1.msra.mxu0 %v794
  %1492 = vmatprep.subr.mxu0 0.0
  %1493 = vmatpush1.msra.mxu0 %v793
  %1494 = vmatprep.subr.mxu0 0.0
  %1495 = vmatpush1.msra.mxu0 %v792
  %1496 = vmatprep.subr.mxu0 0.0
  %1497 = vmatpush1.msra.mxu0 %v791
  %1498 = vmatprep.subr.mxu0 0.0
  %1499 = vmatpush2.msra.mxu0 0.0
  %1500 = vmatprep.subr.mxu0 0.0
  %1501 = vmatpush2.msra.mxu0 0.0
  %1502 = vmatprep.subr.mxu0 0.0
  %1503 = vmatpush2.msra.mxu0 0.0
  %1504 = vmatprep.subr.mxu0 0.0
  %1505 = vmatpush2.msra.mxu0 0.0
  %1506 = vmatprep.subr.mxu0 0.0
  %1507 = vmatpush2.msra.mxu0 0.0
  %1508 = vmatprep.subr.mxu0 0.0
  %1509 = vmatpush2.msra.mxu0 0.0
  %1510 = vmatprep.subr.mxu0 0.0
  %1511 = vmatpush2.msra.mxu0 0.0
  %1512 = vmatprep.subr.mxu0 0.0
  %1513 = vmatpush2.msra.mxu0 0.0
  %1514 = vmatprep.subr.mxu0 0.0
  %1515 = vmatpush2.msra.mxu0 0.0
  %1516 = vmatprep.subr.mxu0 0.0
  %1517 = vmatpush2.msra.mxu0 0.0
  %1518 = vmatprep.subr.mxu0 0.0
  %1519 = vmatpush2.msra.mxu0 0.0
  %1520 = vmatprep.subr.mxu0 0.0
  %1521 = vmatpush2.msra.mxu0 0.0
  %1522 = vmatprep.subr.mxu0 0.0
  %1523 = vmatpush2.msra.mxu0 0.0
  %1524 = vmatprep.subr.mxu0 0.0
  %1525 = vmatpush2.msra.mxu0 0.0
  %1526 = vmatprep.subr.mxu0 0.0
  %1527 = vmatpush2.msra.mxu0 0.0
  %1528 = vmatprep.subr.mxu0 0.0
  %1529 = vmatpush2.msra.mxu0 0.0
  %1530 = vmatprep.mubr.f32.mxu0 0.0
  %1531 = vmatmul.mubr.f32.gmra.mxu0 %v1464
  %v1532 = vpop.f32.mrf.mxu0
  %v1533 = vadd.f32 0.0, %v1532
  %v1534 = vpop.f32.mrf.mxu0
  %1535 = vdwg.mxu0
  %v1536 = vadd.f32 %v940, %v1533
  %v1537 = vtanh.pop %v1536
  %v1538 = vsel %vm36, %v1012, %v1537
  %v1539 = vsel %vm36, %v1087, %v1462
  %v1540 = vsel %vm36, %v1162, %v1387
  %v1541 = vsel %vm36, %v1237, %v1312
  %v1542 = vsel %vm36, %v1312, %v1237
  %v1543 = vsel %vm36, %v1387, %v1162
  %v1544 = vsel %vm36, %v1462, %v1087
  %v1545 = vsel %vm36, %v1537, %v1012
  %v1546 = vld [vmem:[%s1 + $0xf0] sm:$0x1]
  %v1547 = vld [vmem:[%s1 + $0xf8] sm:$0x1]
  %v1548 = vlaneseq
  %v1549 = vshrl.u32 %v1548, 7
  %v1550 = vsub.s32 0, %v1549
  %v1551 = vrot.slane %v1546, %v1550
  %v1552 = vmul.f32 %v1538, %v1551
  %v1553 = vmul.f32 %v1539, %v1551
  %v1554 = vmul.f32 %v1540, %v1551
  %v1555 = vmul.f32 %v1541, %v1551
  %v1556 = vmul.f32 %v1542, %v1551
  %v1557 = vmul.f32 %v1543, %v1551
  %v1558 = vmul.f32 %v1544, %v1551
  %v1559 = vmul.f32 %v1545, %v1551
  %v1560 = vsel %vm174, %v1552, 0.0
  %1561 = vadd.xlane.f32.xlu0 %v1560
  %v1562 = vpop.xlane.xlu0 %1561
  %v1563 = vsel %vm174, %v1553, 0.0
  %1564 = vadd.xlane.f32.xlu0 %v1563
  %v1565 = vpop.xlane.xlu0 %1564
  %v1566 = vsel %vm174, %v1554, 0.0
  %1567 = vadd.xlane.f32.xlu0 %v1566
  %v1568 = vpop.xlane.xlu0 %1567
  %v1569 = vsel %vm174, %v1555, 0.0
  %1570 = vadd.xlane.f32.xlu0 %v1569
  %v1571 = vpop.xlane.xlu0 %1570
  %v1572 = vsel %vm174, %v1556, 0.0
  %1573 = vadd.xlane.f32.xlu0 %v1572
  %v1574 = vpop.xlane.xlu0 %1573
  %v1575 = vsel %vm174, %v1557, 0.0
  %1576 = vadd.xlane.f32.xlu0 %v1575
  %v1577 = vpop.xlane.xlu0 %1576
  %v1578 = vsel %vm174, %v1558, 0.0
  %1579 = vadd.xlane.f32.xlu0 %v1578
  %v1580 = vpop.xlane.xlu0 %1579
  %v1581 = vsel %vm174, %v1559, 0.0
  %1582 = vadd.xlane.f32.xlu0 %v1581
  %v1583 = vpop.xlane.xlu0 %1582
  %v1584 = vlaneseq
  %v1585 = vshrl.u32 %v1584, 7
  %v1586 = vsub.s32 0, %v1585
  %v1587 = vrot.slane %v1547, %v1586
  %v1588 = vadd.f32 %v1562, %v1587
  %v1589 = vadd.f32 %v1565, %v1587
  %v1590 = vadd.f32 %v1568, %v1587
  %v1591 = vadd.f32 %v1571, %v1587
  %v1592 = vadd.f32 %v1574, %v1587
  %v1593 = vadd.f32 %v1577, %v1587
  %v1594 = vadd.f32 %v1580, %v1587
  %v1595 = vadd.f32 %v1583, %v1587
  %1597 = vrot.lane.b32.xlu0 %v1589, 1
  %v1598 = vpop.permute.xlu0 %1597
  %1601 = vrot.lane.b32.xlu0 %v1590, 2
  %v1602 = vpop.permute.xlu0 %1601
  %1605 = vrot.lane.b32.xlu0 %v1591, 3
  %v1606 = vpop.permute.xlu0 %1605
  %1609 = vrot.lane.b32.xlu0 %v1592, 4
  %v1610 = vpop.permute.xlu0 %1609
  %1613 = vrot.lane.b32.xlu0 %v1593, 5
  %v1614 = vpop.permute.xlu0 %1613
  %1617 = vrot.lane.b32.xlu0 %v1594, 6
  %v1618 = vpop.permute.xlu0 %1617
  %1621 = vrot.lane.b32.xlu0 %v1595, 7
  %v1622 = vpop.permute.xlu0 %1621
  %vm1624 = vcmask 7168
  %v1625 = vsel %vm1624, %v1588, %v1598
  %vm1626 = vcmask 15360
  %v1627 = vsel %vm1626, %v1625, %v1602
  %vm1628 = vcmask 23552
  %v1629 = vsel %vm1628, %v1627, %v1606
  %vm1630 = vcmask 31744
  %v1631 = vsel %vm1630, %v1629, %v1610
  %vm1632 = vcmask 39936
  %v1633 = vsel %vm1632, %v1631, %v1614
  %vm1634 = vcmask 48128
  %v1635 = vsel %vm1634, %v1633, %v1618
  %vm1636 = vcmask 56320
  %v1637 = vsel %vm1636, %v1635, %v1622
  %v1638 = vxor.u32 %v1637, 2147483648
  %v1639 = vmul.f32 %v1638, 1.442695
  %v1640 = vpow.pop %v1639
  %v1641 = vadd.f32 %v1640, 1.0
  %v1642 = vrcp.pop %v1641
  %v1643 = vmul.f32 1.0, %v1642
  %vm1644 = vcmask 64512
  %1645 = vst.msk [vmem:[%s2] sm:$0xff] %vm1644, %v1643
  // Predicated region
  $region10: #{_lambda_.1} parent=0 // pred_check
    _
  $region11: #{_lambda_.1} parent=0 // pred_check_branch
    %1647 = sbr.rel (0) target = $region13
  $region12: #{_lambda_.1} parent=0 // pred_region
    _
  $region13: #{_lambda_.1} parent=0 // pred_fallthru
    _
  // Predicated region
  $region14: #{_lambda_.1} parent=0 // pred_check
    _
  $region15: #{_lambda_.1} parent=0 // pred_check_branch
    %1649 = sbr.rel (0) target = $region17
  $region16: #{_lambda_.1} parent=0 // pred_region
    _
  $region17: #{_lambda_.1} parent=0 // pred_fallthru
    _

</llo_original>
